<compile_context>
chip_gen: v5e
topology: v5e:2x2
jax: 0.10.0
libtpu: 0.0.40
codegen_flags: <defaults>
</compile_context>

<pallas_src>
import functools

import jax
import jax.numpy as jnp
from jax.experimental import pallas as pl
from jax.experimental.pallas import tpu as pltpu


def _round_up(x, m):
    return (x + m - 1) // m * m


# --------------------------------------------------------------------------
# Fused kernel: GRU cell + Luong "general" attention + concat->tanh
#               (first grid step) + V-tiled output projection (every step)
# --------------------------------------------------------------------------
def fused_decoder_kernel(
    emb_ref, h_ref, enc_ref,
    w_ih_ref, w_hh_ref, b_ih_ref, b_hh_ref,
    w_attn_ref, b_attn_ref,
    w_cat_rnn_ref, w_cat_ctx_ref, b_cat_ref,
    w_out_ref, b_out_ref,
    logits_ref, hid_ref, attn_ref,
    concat_sc,
    *, approx_recip, use_vpu_attn,
):
    Hp = h_ref.shape[-1]
    cd = w_ih_ref.dtype                       # compute (MXU) dtype, bf16 or f32

    # ---------------- step 0 only: GRU + attention + concat ----------------
    @pl.when(pl.program_id(0) == 0)
    def _():
        x = emb_ref[...]                      # (Bp, Hp) cd
        h = h_ref[...]                        # (Bp, Hp) f32 recurrent state
        h_cd = h.astype(cd)

        # GRU cell, per-gate consumption (PyTorch gate order: r, z, n).
        def gate(lo, hi):
            gi = (jnp.dot(x, w_ih_ref[:, lo:hi], preferred_element_type=jnp.float32)
                  + b_ih_ref[:, lo:hi])
            gh = (jnp.dot(h_cd, w_hh_ref[:, lo:hi], preferred_element_type=jnp.float32)
                  + b_hh_ref[:, lo:hi])
            return gi, gh

        gi_r, gh_r = gate(0, Hp)
        r = jax.nn.sigmoid(gi_r + gh_r)
        gi_z, gh_z = gate(Hp, 2 * Hp)
        z = jax.nn.sigmoid(gi_z + gh_z)
        gi_n, gh_n = gate(2 * Hp, 3 * Hp)
        n = jnp.tanh(gi_n + r * gh_n)
        h_new = (1.0 - z) * n + z * h         # (Bp, Hp) f32  == rnn_output == new hidden

        # Luong "general" attention:
        #   energy[b,l] = h_new[b] . (W_a @ enc[b,l] + b_a)
        #              = (h_new[b] @ W_a) . enc[b,l] + h_new[b] . b_a
        enc = enc_ref[...]                                                    # (Bp, L, Hp) cd
        q = jnp.dot(h_new.astype(cd), w_attn_ref[...],
                    preferred_element_type=jnp.float32)                       # (Bp, Hp) f32
        bias_term = jnp.sum(h_new * b_attn_ref[...], axis=-1, keepdims=True)  # (Bp, 1)

        if use_vpu_attn:
            # Small L: VPU broadcast-multiply + reduce (avoids M=1/K=L MXU pushes).
            enc_f = enc.astype(jnp.float32)
            energy = jnp.sum(q[:, None, :] * enc_f, axis=-1) + bias_term      # (Bp, L)
        else:
            # Large L: MXU route.  (If L were padded, padded positions must be
            # masked to -inf before the softmax; here L is unpadded.)
            energy = jnp.einsum('bqh,blh->bql', q.astype(cd)[:, None, :], enc,
                                preferred_element_type=jnp.float32)[:, 0, :] + bias_term

        # softmax over L (matches F.softmax(attn_energies, dim=1))
        energy = energy - jnp.max(energy, axis=-1, keepdims=True)
        p = jnp.exp(energy)
        s = jnp.sum(p, axis=-1, keepdims=True)
        inv = pl.reciprocal(s, approx=True) if approx_recip else 1.0 / s
        attn = p * inv                                                        # (Bp, L) f32
        attn_ref[...] = attn

        # context = attn_weights.bmm(encoder_outputs.transpose(0,1)).squeeze(1)
        if use_vpu_attn:
            context = jnp.sum(attn[:, :, None] * enc_f, axis=1)               # (Bp, Hp) f32
        else:
            context = jnp.einsum('bql,blh->bqh', attn.astype(cd)[:, None, :], enc,
                                 preferred_element_type=jnp.float32)[:, 0, :]

        # concat -> tanh(Linear(2H -> H))
        concat_out = jnp.tanh(
            jnp.dot(h_new.astype(cd), w_cat_rnn_ref[...],
                    preferred_element_type=jnp.float32)
            + jnp.dot(context.astype(cd), w_cat_ctx_ref[...],
                      preferred_element_type=jnp.float32)
            + b_cat_ref[...])                                                 # (Bp, Hp) f32

        concat_sc[...] = concat_out.astype(cd)
        hid_ref[...] = h_new

    # ---------------- every step: output projection tile ----------------
    logits_ref[...] = (
        jnp.dot(concat_sc[...], w_out_ref[...], preferred_element_type=jnp.float32)
        + b_out_ref[...])


# --------------------------------------------------------------------------
# One-time parameter preparation (hoisted out of the per-token decode loop)
# --------------------------------------------------------------------------
def prepare_params(params, compute_dtype=jnp.bfloat16, v_tile=4096):
    H = params['w_attn'].shape[0]
    V = params['w_out'].shape[0]
    Hp = _round_up(H, 128)
    tV = min(v_tile, _round_up(V, 128))        # lane-multiple V tile
    Vp = _round_up(V, tV)
    is_bf16 = jnp.dtype(compute_dtype) == jnp.dtype(jnp.bfloat16)

    def pad2(w, r, c):
        return jnp.pad(w, ((0, r - w.shape[0]), (0, c - w.shape[1])))

    def gates_t(w):          # (3H, H) -> (Hp, 3Hp), per-gate transpose + pad
        g = w.reshape(3, H, H)
        return jnp.concatenate([pad2(g[i].T, Hp, Hp) for i in range(3)], axis=1)

    def gates_b(b):          # (3H,) -> (1, 3Hp)
        g = b.reshape(3, H)
        return jnp.pad(g, ((0, 0), (0, Hp - H))).reshape(1, 3 * Hp)

    w_cat_t = params['w_concat'].T              # (2H, H)
    return {
        'H': H, 'Hp': Hp, 'V': V, 'Vp': Vp, 'tV': tV,
        'dtype': compute_dtype,
        'bsub': 16 if is_bf16 else 8,            # batch sublane pad (bf16 packs [16,128])
        'approx_recip': is_bf16,
        'embedding': pad2(params['embedding'], V, Hp).astype(compute_dtype),
        'w_ih_t': gates_t(params['w_ih']).astype(compute_dtype),
        'w_hh_t': gates_t(params['w_hh']).astype(compute_dtype),
        'b_ih': gates_b(params['b_ih']).astype(jnp.float32),
        'b_hh': gates_b(params['b_hh']).astype(jnp.float32),
        'w_attn': pad2(params['w_attn'], Hp, Hp).astype(compute_dtype),
        'b_attn': pad2(params['b_attn'].reshape(1, -1), 1, Hp).astype(jnp.float32),
        'w_cat_rnn': pad2(w_cat_t[:H], Hp, Hp).astype(compute_dtype),
        'w_cat_ctx': pad2(w_cat_t[H:], Hp, Hp).astype(compute_dtype),
        'b_concat': pad2(params['b_concat'].reshape(1, -1), 1, Hp).astype(jnp.float32),
        'w_out_t': pad2(params['w_out'].T, Hp, Vp).astype(compute_dtype),
        'b_out': pad2(params['b_out'].reshape(1, -1), 1, Vp).astype(jnp.float32),
    }


def prepare_encoder_outputs(prep, encoder_outputs, batch_pad=None):
    """(L, B, H) -> (Bp, L, Hp) in compute dtype.  Call ONCE per sequence."""
    L, B, H = encoder_outputs.shape
    Bp = batch_pad if batch_pad is not None else _round_up(B, prep['bsub'])
    enc = jnp.transpose(encoder_outputs, (1, 0, 2))
    enc = jnp.pad(enc, ((0, Bp - B), (0, 0), (0, prep['Hp'] - H)))
    return enc.astype(prep['dtype'])


# --------------------------------------------------------------------------
# Per-step decode (expects pre-prepared encoder outputs -> use in the loop)
# --------------------------------------------------------------------------
def decode_step(prep, input_seq, last_hidden, enc_prepared):
    """input_seq: (B,) int32, last_hidden: (1,B,H) f32, enc_prepared: (Bp,L,Hp) cd."""
    B = input_seq.shape[0]
    Bp, L, _ = enc_prepared.shape
    H, Hp, V, Vp, tV = prep['H'], prep['Hp'], prep['V'], prep['Vp'], prep['tV']
    cd = prep['dtype']
    n_vt = Vp // tV
    use_vpu_attn = L <= 64

    # Embedding lookup + dropout (eval mode => identity); pad batch rows.
    emb = prep['embedding'][input_seq]                                  # (B, Hp) cd
    emb = jnp.pad(emb, ((0, Bp - B), (0, 0)))
    h_prev = jnp.pad(last_hidden[0].astype(jnp.float32),
                     ((0, Bp - B), (0, Hp - H)))                        # (Bp, Hp) f32

    # Scoped-VMEM estimate (x2 for pipeline double-buffering + headroom); the
    # explicit limit matters on v5e (16 MiB default) once H is realistic.
    cdb = jnp.dtype(cd).itemsize
    est = 2 * ((9 * Hp * Hp + 6 * Hp) * cdb            # GRU/attn/cat weights + biases
               + 2 * Hp * tV * cdb + 2 * tV * 4        # w_out / b_out tiles (double-buffered)
               + (Bp * L * Hp + 2 * Bp * Hp) * cdb     # enc, emb, concat scratch
               + Bp * Hp * 4 * 2                       # h_prev, hid
               + Bp * L * 4 + 2 * Bp * tV * 4)         # attn, logits tiles
    vmem_limit = int(min(max(est + (2 << 20), 32 << 20), 128 << 20))

    logits, h_new, attn = pl.pallas_call(
        functools.partial(fused_decoder_kernel,
                          approx_recip=prep['approx_recip'],
                          use_vpu_attn=use_vpu_attn),
        out_shape=(
            jax.ShapeDtypeStruct((Bp, Vp), jnp.float32),   # logits
            jax.ShapeDtypeStruct((Bp, Hp), jnp.float32),   # new hidden state
            jax.ShapeDtypeStruct((Bp, L), jnp.float32),    # attention weights
        ),
        grid=(n_vt,),
        in_specs=[
            pl.BlockSpec((Bp, Hp), lambda j: (0, 0)),          # emb
            pl.BlockSpec((Bp, Hp), lambda j: (0, 0)),          # h_prev
            pl.BlockSpec((Bp, L, Hp), lambda j: (0, 0, 0)),    # enc
            pl.BlockSpec((Hp, 3 * Hp), lambda j: (0, 0)),      # w_ih_t
            pl.BlockSpec((Hp, 3 * Hp), lambda j: (0, 0)),      # w_hh_t
            pl.BlockSpec((1, 3 * Hp), lambda j: (0, 0)),       # b_ih
            pl.BlockSpec((1, 3 * Hp), lambda j: (0, 0)),       # b_hh
            pl.BlockSpec((Hp, Hp), lambda j: (0, 0)),          # w_attn
            pl.BlockSpec((1, Hp), lambda j: (0, 0)),           # b_attn
            pl.BlockSpec((Hp, Hp), lambda j: (0, 0)),          # w_cat_rnn
            pl.BlockSpec((Hp, Hp), lambda j: (0, 0)),          # w_cat_ctx
            pl.BlockSpec((1, Hp), lambda j: (0, 0)),           # b_concat
            pl.BlockSpec((Hp, tV), lambda j: (0, j)),          # w_out tile (streamed)
            pl.BlockSpec((1, tV), lambda j: (0, j)),           # b_out tile
        ],
        out_specs=(
            pl.BlockSpec((Bp, tV), lambda j: (0, j)),          # logits tile (lane-dense)
            pl.BlockSpec((Bp, Hp), lambda j: (0, 0)),          # hid (resident, written once)
            pl.BlockSpec((Bp, L), lambda j: (0, 0)),           # attn (resident, written once)
        ),
        scratch_shapes=[pltpu.VMEM((Bp, Hp), cd)],             # concat carry across V tiles
        compiler_params=pltpu.CompilerParams(
            dimension_semantics=("arbitrary",),                # scratch carry -> sequential
            vmem_limit_bytes=vmem_limit),
    )(emb, h_prev, enc_prepared,
      prep['w_ih_t'], prep['w_hh_t'], prep['b_ih'], prep['b_hh'],
      prep['w_attn'], prep['b_attn'],
      prep['w_cat_rnn'], prep['w_cat_ctx'], prep['b_concat'],
      prep['w_out_t'], prep['b_out'])

    # Return in PyTorch shapes: (B, V), (n_layers=1, B, H), (B, 1, L)
    return logits[:B, :V], h_new[None, :B, :H], attn[:B, None, :L]


# Thin PyTorch-shaped entry point (prepares enc itself; for a real decode loop
# call prepare_encoder_outputs once and use decode_step directly).
def luong_attn_decoder_forward(prep, input_seq, last_hidden, encoder_outputs):
    enc = prepare_encoder_outputs(prep, encoder_outputs)
    return decode_step(prep, input_seq, last_hidden, enc)


# --------------------------------------------------------------------------
# Pure-JAX reference (matches the PyTorch module semantics, f32)
# --------------------------------------------------------------------------
def reference_forward(params, input_seq, last_hidden, encoder_outputs):
    embedded = params['embedding'][input_seq]
    h = last_hidden[0]
    gi = embedded @ params['w_ih'].T + params['b_ih']
    gh = h @ params['w_hh'].T + params['b_hh']
    i_r, i_z, i_n = jnp.split(gi, 3, axis=1)
    h_r, h_z, h_n = jnp.split(gh, 3, axis=1)
    r = jax.nn.sigmoid(i_r + h_r)
    z = jax.nn.sigmoid(i_z + h_z)
    n = jnp.tanh(i_n + r * h_n)
    h_new = (1.0 - z) * n + z * h
    proj = encoder_outputs @ params['w_attn'].T + params['b_attn']   # (L, B, H)
    energy = jnp.einsum('bh,lbh->bl', h_new, proj)
    attn = jax.nn.softmax(energy, axis=-1)
    context = jnp.einsum('bl,lbh->bh', attn, encoder_outputs)
    concat_in = jnp.concatenate([h_new, context], axis=1)
    concat_out = jnp.tanh(concat_in @ params['w_concat'].T + params['b_concat'])
    output = concat_out @ params['w_out'].T + params['b_out']
    return output, h_new[None], attn[:, None, :]


def init_params(key, hidden_size, output_size):
    H, V = hidden_size, output_size
    ks = jax.random.split(key, 12)
    u = lambda k, shape: jax.random.uniform(k, shape, jnp.float32, -0.1, 0.1)
    return {
        'embedding': u(ks[0], (V, H)),
        'w_ih': u(ks[1], (3 * H, H)),
        'w_hh': u(ks[2], (3 * H, H)),
        'b_ih': u(ks[3], (3 * H,)),
        'b_hh': u(ks[4], (3 * H,)),
        'w_attn': u(ks[5], (H, H)),
        'b_attn': u(ks[6], (H,)),
        'w_concat': u(ks[7], (H, 2 * H)),
        'b_concat': u(ks[8], (H,)),
        'w_out': u(ks[9], (V, H)),
        'b_out': u(ks[10], (V,)),
    }


if __name__ == "__main__":
    B, H, L, V = 2, 32, 8, 50   # batch, hidden, encoder steps, vocab size
    key = jax.random.PRNGKey(0)
    k_params, k_in, k_hid, k_enc = jax.random.split(key, 4)

    params = init_params(k_params, H, V)
    input_seq = jax.random.randint(k_in, (B,), 0, V, dtype=jnp.int32)        # (B,)
    last_hidden = jax.random.normal(k_hid, (1, B, H), jnp.float32)           # (1, B, H)
    encoder_outputs = jax.random.normal(k_enc, (L, B, H), jnp.float32)       # (L, B, H)

    ref_out, ref_hid, ref_attn = reference_forward(params, input_seq, last_hidden, encoder_outputs)

    # ---- float32 mode: tight numerical check of kernel semantics ----
    prep32 = prepare_params(params, compute_dtype=jnp.float32)
    out, hid, attn_w = jax.block_until_ready(
        luong_attn_decoder_forward(prep32, input_seq, last_hidden, encoder_outputs))
    assert out.shape == (B, V) and hid.shape == (1, B, H) and attn_w.shape == (B, 1, L)
    assert jnp.allclose(out, ref_out, atol=1e-4, rtol=1e-4)
    assert jnp.allclose(hid, ref_hid, atol=1e-4, rtol=1e-4)
    assert jnp.allclose(attn_w, ref_attn, atol=1e-4, rtol=1e-4)

    # ---- bfloat16 mode: performance configuration (bf16 weights, approx recip) ----
    prep16 = prepare_params(params, compute_dtype=jnp.bfloat16)
    enc16 = prepare_encoder_outputs(prep16, encoder_outputs)   # hoisted (once per sequence)
    out16, hid16, attn16 = jax.block_until_ready(
        decode_step(prep16, input_seq, last_hidden, enc16))
    assert out16.shape == (B, V) and hid16.shape == (1, B, H) and attn16.shape == (B, 1, L)
    assert jnp.allclose(out16, ref_out, atol=3e-2, rtol=3e-2)
    assert jnp.allclose(hid16, ref_hid, atol=3e-2, rtol=3e-2)
    assert jnp.allclose(attn16, ref_attn, atol=3e-2, rtol=3e-2)

    print("KERNEL_OK")
</pallas_src>

<mosaic_0001>
module attributes {stable_mosaic.version = 11 : i64} {
  func.func @fused_decoder_kernel(%arg0: i32, %arg1: memref<8x128xf32, #tpu.memory_space<vmem>>, %arg2: memref<8x128xf32, #tpu.memory_space<vmem>>, %arg3: memref<8x8x128xf32, #tpu.memory_space<vmem>>, %arg4: memref<128x384xf32, #tpu.memory_space<vmem>>, %arg5: memref<128x384xf32, #tpu.memory_space<vmem>>, %arg6: memref<1x384xf32, #tpu.memory_space<vmem>>, %arg7: memref<1x384xf32, #tpu.memory_space<vmem>>, %arg8: memref<128x128xf32, #tpu.memory_space<vmem>>, %arg9: memref<1x128xf32, #tpu.memory_space<vmem>>, %arg10: memref<128x128xf32, #tpu.memory_space<vmem>>, %arg11: memref<128x128xf32, #tpu.memory_space<vmem>>, %arg12: memref<1x128xf32, #tpu.memory_space<vmem>>, %arg13: memref<128x128xf32, #tpu.memory_space<vmem>>, %arg14: memref<1x128xf32, #tpu.memory_space<vmem>>, %arg15: memref<8x128xf32, #tpu.memory_space<vmem>>, %arg16: memref<8x128xf32, #tpu.memory_space<vmem>>, %arg17: memref<8x8xf32, #tpu.memory_space<vmem>>, %arg18: memref<8x128xf32, #tpu.memory_space<vmem>>) attributes {dimension_semantics = [#tpu.dimension_semantics<arbitrary>], iteration_bounds = array<i64: 1>, scalar_prefetch = 0 : i64, scratch_operands = 1 : i64, tpu.core_type = #tpu.core_type<tc>, window_params = [{pipeline_mode = #tpu.pipeline_mode<synchronous>, transform_indices = @transform_0, window_bounds = array<i64: 8, 128>}, {pipeline_mode = #tpu.pipeline_mode<synchronous>, transform_indices = @transform_1, window_bounds = array<i64: 8, 128>}, {pipeline_mode = #tpu.pipeline_mode<synchronous>, transform_indices = @transform_2, window_bounds = array<i64: 8, 8, 128>}, {pipeline_mode = #tpu.pipeline_mode<synchronous>, transform_indices = @transform_3, window_bounds = array<i64: 128, 384>}, {pipeline_mode = #tpu.pipeline_mode<synchronous>, transform_indices = @transform_4, window_bounds = array<i64: 128, 384>}, {pipeline_mode = #tpu.pipeline_mode<synchronous>, transform_indices = @transform_5, window_bounds = array<i64: 1, 384>}, {pipeline_mode = #tpu.pipeline_mode<synchronous>, transform_indices = @transform_6, window_bounds = array<i64: 1, 384>}, {pipeline_mode = #tpu.pipeline_mode<synchronous>, transform_indices = @transform_7, window_bounds = array<i64: 128, 128>}, {pipeline_mode = #tpu.pipeline_mode<synchronous>, transform_indices = @transform_8, window_bounds = array<i64: 1, 128>}, {pipeline_mode = #tpu.pipeline_mode<synchronous>, transform_indices = @transform_9, window_bounds = array<i64: 128, 128>}, {pipeline_mode = #tpu.pipeline_mode<synchronous>, transform_indices = @transform_10, window_bounds = array<i64: 128, 128>}, {pipeline_mode = #tpu.pipeline_mode<synchronous>, transform_indices = @transform_11, window_bounds = array<i64: 1, 128>}, {transform_indices = @transform_12, window_bounds = array<i64: 128, 128>}, {transform_indices = @transform_13, window_bounds = array<i64: 1, 128>}, {transform_indices = @transform_14, window_bounds = array<i64: 8, 128>}, {pipeline_mode = #tpu.pipeline_mode<synchronous>, transform_indices = @transform_15, window_bounds = array<i64: 8, 128>}, {pipeline_mode = #tpu.pipeline_mode<synchronous>, transform_indices = @transform_16, window_bounds = array<i64: 8, 8>}]} {
    %c0_i32 = arith.constant 0 : i32
    %0 = arith.cmpi eq, %arg0, %c0_i32 : i32
    %1 = arith.extui %0 : i1 to i32
    %c0_i32_0 = arith.constant 0 : i32
    %2 = arith.cmpi ne, %1, %c0_i32_0 : i32
    scf.if %2 {
      %c0_8 = arith.constant 0 : index
      %c0_9 = arith.constant 0 : index
      %10 = vector.load %arg1[%c0_8, %c0_9] : memref<8x128xf32, #tpu.memory_space<vmem>>, vector<8x128xf32>
      %c0_10 = arith.constant 0 : index
      %c0_11 = arith.constant 0 : index
      %11 = vector.load %arg2[%c0_10, %c0_11] : memref<8x128xf32, #tpu.memory_space<vmem>>, vector<8x128xf32>
      %c0_12 = arith.constant 0 : index
      %c0_13 = arith.constant 0 : index
      %12 = vector.load %arg4[%c0_12, %c0_13] : memref<128x384xf32, #tpu.memory_space<vmem>>, vector<128x128xf32>
      %cst_14 = arith.constant dense<0.000000e+00> : vector<8x128xf32>
      %13 = tpu.matmul %10, %12, %cst_14 {dimension_numbers = #tpu.dot_dimension_numbers<[1], [0], [0], [1], [0, 0, 1, 1], [], []>} : vector<8x128xf32>, vector<128x128xf32>, vector<8x128xf32> -> vector<8x128xf32>
      %c0_15 = arith.constant 0 : index
      %c0_16 = arith.constant 0 : index
      %14 = vector.load %arg6[%c0_15, %c0_16] : memref<1x384xf32, #tpu.memory_space<vmem>>, vector<1x128xf32>
      %15 = vector.broadcast %14 : vector<1x128xf32> to vector<8x128xf32>
      %16 = arith.addf %13, %15 : vector<8x128xf32>
      %c0_17 = arith.constant 0 : index
      %c0_18 = arith.constant 0 : index
      %17 = vector.load %arg5[%c0_17, %c0_18] : memref<128x384xf32, #tpu.memory_space<vmem>>, vector<128x128xf32>
      %cst_19 = arith.constant dense<0.000000e+00> : vector<8x128xf32>
      %18 = tpu.matmul %11, %17, %cst_19 {dimension_numbers = #tpu.dot_dimension_numbers<[1], [0], [0], [1], [0, 0, 1, 1], [], []>} : vector<8x128xf32>, vector<128x128xf32>, vector<8x128xf32> -> vector<8x128xf32>
      %c0_20 = arith.constant 0 : index
      %c0_21 = arith.constant 0 : index
      %19 = vector.load %arg7[%c0_20, %c0_21] : memref<1x384xf32, #tpu.memory_space<vmem>>, vector<1x128xf32>
      %20 = vector.broadcast %19 : vector<1x128xf32> to vector<8x128xf32>
      %21 = arith.addf %18, %20 : vector<8x128xf32>
      %22 = arith.addf %16, %21 : vector<8x128xf32>
      %23 = arith.negf %22 : vector<8x128xf32>
      %24 = math.exp %23 : vector<8x128xf32>
      %cst_22 = arith.constant 1.000000e+00 : f32
      %25 = vector.broadcast %cst_22 : f32 to vector<8x128xf32>
      %26 = arith.addf %25, %24 : vector<8x128xf32>
      %27 = arith.divf %25, %26 : vector<8x128xf32>
      %c0_23 = arith.constant 0 : index
      %c128 = arith.constant 128 : index
      %28 = vector.load %arg4[%c0_23, %c128] : memref<128x384xf32, #tpu.memory_space<vmem>>, vector<128x128xf32>
      %cst_24 = arith.constant dense<0.000000e+00> : vector<8x128xf32>
      %29 = tpu.matmul %10, %28, %cst_24 {dimension_numbers = #tpu.dot_dimension_numbers<[1], [0], [0], [1], [0, 0, 1, 1], [], []>} : vector<8x128xf32>, vector<128x128xf32>, vector<8x128xf32> -> vector<8x128xf32>
      %c0_25 = arith.constant 0 : index
      %c128_26 = arith.constant 128 : index
      %30 = vector.load %arg6[%c0_25, %c128_26] : memref<1x384xf32, #tpu.memory_space<vmem>>, vector<1x128xf32>
      %31 = vector.broadcast %30 : vector<1x128xf32> to vector<8x128xf32>
      %32 = arith.addf %29, %31 : vector<8x128xf32>
      %c0_27 = arith.constant 0 : index
      %c128_28 = arith.constant 128 : index
      %33 = vector.load %arg5[%c0_27, %c128_28] : memref<128x384xf32, #tpu.memory_space<vmem>>, vector<128x128xf32>
      %cst_29 = arith.constant dense<0.000000e+00> : vector<8x128xf32>
      %34 = tpu.matmul %11, %33, %cst_29 {dimension_numbers = #tpu.dot_dimension_numbers<[1], [0], [0], [1], [0, 0, 1, 1], [], []>} : vector<8x128xf32>, vector<128x128xf32>, vector<8x128xf32> -> vector<8x128xf32>
      %c0_30 = arith.constant 0 : index
      %c128_31 = arith.constant 128 : index
      %35 = vector.load %arg7[%c0_30, %c128_31] : memref<1x384xf32, #tpu.memory_space<vmem>>, vector<1x128xf32>
      %36 = vector.broadcast %35 : vector<1x128xf32> to vector<8x128xf32>
      %37 = arith.addf %34, %36 : vector<8x128xf32>
      %38 = arith.addf %32, %37 : vector<8x128xf32>
      %39 = arith.negf %38 : vector<8x128xf32>
      %40 = math.exp %39 : vector<8x128xf32>
      %cst_32 = arith.constant 1.000000e+00 : f32
      %41 = vector.broadcast %cst_32 : f32 to vector<8x128xf32>
      %42 = arith.addf %41, %40 : vector<8x128xf32>
      %43 = arith.divf %41, %42 : vector<8x128xf32>
      %c0_33 = arith.constant 0 : index
      %c256 = arith.constant 256 : index
      %44 = vector.load %arg4[%c0_33, %c256] : memref<128x384xf32, #tpu.memory_space<vmem>>, vector<128x128xf32>
      %cst_34 = arith.constant dense<0.000000e+00> : vector<8x128xf32>
      %45 = tpu.matmul %10, %44, %cst_34 {dimension_numbers = #tpu.dot_dimension_numbers<[1], [0], [0], [1], [0, 0, 1, 1], [], []>} : vector<8x128xf32>, vector<128x128xf32>, vector<8x128xf32> -> vector<8x128xf32>
      %c0_35 = arith.constant 0 : index
      %c256_36 = arith.constant 256 : index
      %46 = vector.load %arg6[%c0_35, %c256_36] : memref<1x384xf32, #tpu.memory_space<vmem>>, vector<1x128xf32>
      %47 = vector.broadcast %46 : vector<1x128xf32> to vector<8x128xf32>
      %48 = arith.addf %45, %47 : vector<8x128xf32>
      %c0_37 = arith.constant 0 : index
      %c256_38 = arith.constant 256 : index
      %49 = vector.load %arg5[%c0_37, %c256_38] : memref<128x384xf32, #tpu.memory_space<vmem>>, vector<128x128xf32>
      %cst_39 = arith.constant dense<0.000000e+00> : vector<8x128xf32>
      %50 = tpu.matmul %11, %49, %cst_39 {dimension_numbers = #tpu.dot_dimension_numbers<[1], [0], [0], [1], [0, 0, 1, 1], [], []>} : vector<8x128xf32>, vector<128x128xf32>, vector<8x128xf32> -> vector<8x128xf32>
      %c0_40 = arith.constant 0 : index
      %c256_41 = arith.constant 256 : index
      %51 = vector.load %arg7[%c0_40, %c256_41] : memref<1x384xf32, #tpu.memory_space<vmem>>, vector<1x128xf32>
      %52 = vector.broadcast %51 : vector<1x128xf32> to vector<8x128xf32>
      %53 = arith.addf %50, %52 : vector<8x128xf32>
      %54 = arith.mulf %27, %53 : vector<8x128xf32>
      %55 = arith.addf %48, %54 : vector<8x128xf32>
      %56 = math.tanh %55 : vector<8x128xf32>
      %cst_42 = arith.constant 1.000000e+00 : f32
      %57 = vector.broadcast %cst_42 : f32 to vector<8x128xf32>
      %58 = arith.subf %57, %43 : vector<8x128xf32>
      %59 = arith.mulf %58, %56 : vector<8x128xf32>
      %60 = arith.mulf %43, %11 : vector<8x128xf32>
      %61 = arith.addf %59, %60 : vector<8x128xf32>
      %c0_43 = arith.constant 0 : index
      %c0_44 = arith.constant 0 : index
      %c0_45 = arith.constant 0 : index
      %62 = vector.load %arg3[%c0_43, %c0_44, %c0_45] : memref<8x8x128xf32, #tpu.memory_space<vmem>>, vector<8x8x128xf32>
      %c0_46 = arith.constant 0 : index
      %c0_47 = arith.constant 0 : index
      %63 = vector.load %arg8[%c0_46, %c0_47] : memref<128x128xf32, #tpu.memory_space<vmem>>, vector<128x128xf32>
      %cst_48 = arith.constant dense<0.000000e+00> : vector<8x128xf32>
      %64 = tpu.matmul %61, %63, %cst_48 {dimension_numbers = #tpu.dot_dimension_numbers<[1], [0], [0], [1], [0, 0, 1, 1], [], []>} : vector<8x128xf32>, vector<128x128xf32>, vector<8x128xf32> -> vector<8x128xf32>
      %c0_49 = arith.constant 0 : index
      %c0_50 = arith.constant 0 : index
      %65 = vector.load %arg9[%c0_49, %c0_50] : memref<1x128xf32, #tpu.memory_space<vmem>>, vector<1x128xf32>
      %66 = vector.broadcast %65 : vector<1x128xf32> to vector<8x128xf32>
      %67 = arith.mulf %61, %66 : vector<8x128xf32>
      %cst_51 = arith.constant dense<0.000000e+00> : vector<8xf32>
      %68 = vector.multi_reduction <add>, %67, %cst_51 [1] : vector<8x128xf32> to vector<8xf32>
      %69 = vector.shape_cast %68 : vector<8xf32> to vector<8x1xf32>
      %70 = vector.shape_cast %64 : vector<8x128xf32> to vector<8x1x128xf32>
      %71 = vector.broadcast %70 : vector<8x1x128xf32> to vector<8x8x128xf32>
      %72 = arith.mulf %71, %62 : vector<8x8x128xf32>
      %cst_52 = arith.constant dense<0.000000e+00> : vector<8x8xf32>
      %73 = vector.multi_reduction <add>, %72, %cst_52 [2] : vector<8x8x128xf32> to vector<8x8xf32>
      %74 = vector.broadcast %69 : vector<8x1xf32> to vector<8x8xf32>
      %75 = arith.addf %73, %74 : vector<8x8xf32>
      %cst_53 = arith.constant dense<0xFF800000> : vector<8xf32>
      %76 = vector.multi_reduction <maximumf>, %75, %cst_53 [1] : vector<8x8xf32> to vector<8xf32>
      %77 = vector.shape_cast %76 : vector<8xf32> to vector<8x1xf32>
      %78 = vector.broadcast %77 : vector<8x1xf32> to vector<8x8xf32>
      %79 = arith.subf %75, %78 : vector<8x8xf32>
      %80 = math.exp %79 : vector<8x8xf32>
      %cst_54 = arith.constant dense<0.000000e+00> : vector<8xf32>
      %81 = vector.multi_reduction <add>, %80, %cst_54 [1] : vector<8x8xf32> to vector<8xf32>
      %82 = vector.shape_cast %81 : vector<8xf32> to vector<8x1xf32>
      %cst_55 = arith.constant 1.000000e+00 : f32
      %83 = vector.broadcast %cst_55 : f32 to vector<8x1xf32>
      %84 = arith.divf %83, %82 : vector<8x1xf32>
      %85 = vector.broadcast %84 : vector<8x1xf32> to vector<8x8xf32>
      %86 = arith.mulf %80, %85 : vector<8x8xf32>
      %c0_56 = arith.constant 0 : index
      %c0_57 = arith.constant 0 : index
      %87 = vector.load %arg17[%c0_56, %c0_57] : memref<8x8xf32, #tpu.memory_space<vmem>>, vector<8x8xf32>
      tpu.vector_store %arg17[%c0_56, %c0_57], %86 {strides = array<i32>} : memref<8x8xf32, #tpu.memory_space<vmem>>, vector<8x8xf32>,
      %88 = vector.shape_cast %86 : vector<8x8xf32> to vector<8x8x1xf32>
      %89 = vector.broadcast %88 : vector<8x8x1xf32> to vector<8x8x128xf32>
      %90 = arith.mulf %89, %62 : vector<8x8x128xf32>
      %cst_58 = arith.constant dense<0.000000e+00> : vector<8x128xf32>
      %91 = vector.multi_reduction <add>, %90, %cst_58 [1] : vector<8x8x128xf32> to vector<8x128xf32>
      %c0_59 = arith.constant 0 : index
      %c0_60 = arith.constant 0 : index
      %92 = vector.load %arg10[%c0_59, %c0_60] : memref<128x128xf32, #tpu.memory_space<vmem>>, vector<128x128xf32>
      %cst_61 = arith.constant dense<0.000000e+00> : vector<8x128xf32>
      %93 = tpu.matmul %61, %92, %cst_61 {dimension_numbers = #tpu.dot_dimension_numbers<[1], [0], [0], [1], [0, 0, 1, 1], [], []>} : vector<8x128xf32>, vector<128x128xf32>, vector<8x128xf32> -> vector<8x128xf32>
      %c0_62 = arith.constant 0 : index
      %c0_63 = arith.constant 0 : index
      %94 = vector.load %arg11[%c0_62, %c0_63] : memref<128x128xf32, #tpu.memory_space<vmem>>, vector<128x128xf32>
      %cst_64 = arith.constant dense<0.000000e+00> : vector<8x128xf32>
      %95 = tpu.matmul %91, %94, %cst_64 {dimension_numbers = #tpu.dot_dimension_numbers<[1], [0], [0], [1], [0, 0, 1, 1], [], []>} : vector<8x128xf32>, vector<128x128xf32>, vector<8x128xf32> -> vector<8x128xf32>
      %96 = arith.addf %93, %95 : vector<8x128xf32>
      %c0_65 = arith.constant 0 : index
      %c0_66 = arith.constant 0 : index
      %97 = vector.load %arg12[%c0_65, %c0_66] : memref<1x128xf32, #tpu.memory_space<vmem>>, vector<1x128xf32>
      %98 = vector.broadcast %97 : vector<1x128xf32> to vector<8x128xf32>
      %99 = arith.addf %96, %98 : vector<8x128xf32>
      %100 = math.tanh %99 : vector<8x128xf32>
      %c0_67 = arith.constant 0 : index
      %c0_68 = arith.constant 0 : index
      %101 = vector.load %arg18[%c0_67, %c0_68] : memref<8x128xf32, #tpu.memory_space<vmem>>, vector<8x128xf32>
      tpu.vector_store %arg18[%c0_67, %c0_68], %100 {strides = array<i32>} : memref<8x128xf32, #tpu.memory_space<vmem>>, vector<8x128xf32>,
      %c0_69 = arith.constant 0 : index
      %c0_70 = arith.constant 0 : index
      %102 = vector.load %arg16[%c0_69, %c0_70] : memref<8x128xf32, #tpu.memory_space<vmem>>, vector<8x128xf32>
      tpu.vector_store %arg16[%c0_69, %c0_70], %61 {strides = array<i32>} : memref<8x128xf32, #tpu.memory_space<vmem>>, vector<8x128xf32>,
    } else {
    }
    %c0 = arith.constant 0 : index
    %c0_1 = arith.constant 0 : index
    %3 = vector.load %arg18[%c0, %c0_1] : memref<8x128xf32, #tpu.memory_space<vmem>>, vector<8x128xf32>
    %c0_2 = arith.constant 0 : index
    %c0_3 = arith.constant 0 : index
    %4 = vector.load %arg13[%c0_2, %c0_3] : memref<128x128xf32, #tpu.memory_space<vmem>>, vector<128x128xf32>
    %cst = arith.constant dense<0.000000e+00> : vector<8x128xf32>
    %5 = tpu.matmul %3, %4, %cst {dimension_numbers = #tpu.dot_dimension_numbers<[1], [0], [0], [1], [0, 0, 1, 1], [], []>} : vector<8x128xf32>, vector<128x128xf32>, vector<8x128xf32> -> vector<8x128xf32>
    %c0_4 = arith.constant 0 : index
    %c0_5 = arith.constant 0 : index
    %6 = vector.load %arg14[%c0_4, %c0_5] : memref<1x128xf32, #tpu.memory_space<vmem>>, vector<1x128xf32>
    %7 = vector.broadcast %6 : vector<1x128xf32> to vector<8x128xf32>
    %8 = arith.addf %5, %7 : vector<8x128xf32>
    %c0_6 = arith.constant 0 : index
    %c0_7 = arith.constant 0 : index
    %9 = vector.load %arg15[%c0_6, %c0_7] : memref<8x128xf32, #tpu.memory_space<vmem>>, vector<8x128xf32>
    tpu.vector_store %arg15[%c0_6, %c0_7], %8 {strides = array<i32>} : memref<8x128xf32, #tpu.memory_space<vmem>>, vector<8x128xf32>,
    return
  }
  func.func @transform_0(%arg0: i32) -> (i32, i32) {
    %c0_i32 = arith.constant 0 : i32
    %c0_i32_0 = arith.constant 0 : i32
    %c0_i32_1 = arith.constant 0 : i32
    return %c0_i32, %c0_i32_0 : i32, i32
  }
  func.func @transform_1(%arg0: i32) -> (i32, i32) {
    %c0_i32 = arith.constant 0 : i32
    %c0_i32_0 = arith.constant 0 : i32
    %c0_i32_1 = arith.constant 0 : i32
    return %c0_i32, %c0_i32_0 : i32, i32
  }
  func.func @transform_2(%arg0: i32) -> (i32, i32, i32) {
    %c0_i32 = arith.constant 0 : i32
    %c0_i32_0 = arith.constant 0 : i32
    %c0_i32_1 = arith.constant 0 : i32
    %c0_i32_2 = arith.constant 0 : i32
    return %c0_i32, %c0_i32_0, %c0_i32_1 : i32, i32, i32
  }
  func.func @transform_3(%arg0: i32) -> (i32, i32) {
    %c0_i32 = arith.constant 0 : i32
    %c0_i32_0 = arith.constant 0 : i32
    %c0_i32_1 = arith.constant 0 : i32
    return %c0_i32, %c0_i32_0 : i32, i32
  }
  func.func @transform_4(%arg0: i32) -> (i32, i32) {
    %c0_i32 = arith.constant 0 : i32
    %c0_i32_0 = arith.constant 0 : i32
    %c0_i32_1 = arith.constant 0 : i32
    return %c0_i32, %c0_i32_0 : i32, i32
  }
  func.func @transform_5(%arg0: i32) -> (i32, i32) {
    %c0_i32 = arith.constant 0 : i32
    %c0_i32_0 = arith.constant 0 : i32
    %c0_i32_1 = arith.constant 0 : i32
    return %c0_i32, %c0_i32_0 : i32, i32
  }
  func.func @transform_6(%arg0: i32) -> (i32, i32) {
    %c0_i32 = arith.constant 0 : i32
    %c0_i32_0 = arith.constant 0 : i32
    %c0_i32_1 = arith.constant 0 : i32
    return %c0_i32, %c0_i32_0 : i32, i32
  }
  func.func @transform_7(%arg0: i32) -> (i32, i32) {
    %c0_i32 = arith.constant 0 : i32
    %c0_i32_0 = arith.constant 0 : i32
    %c0_i32_1 = arith.constant 0 : i32
    return %c0_i32, %c0_i32_0 : i32, i32
  }
  func.func @transform_8(%arg0: i32) -> (i32, i32) {
    %c0_i32 = arith.constant 0 : i32
    %c0_i32_0 = arith.constant 0 : i32
    %c0_i32_1 = arith.constant 0 : i32
    return %c0_i32, %c0_i32_0 : i32, i32
  }
  func.func @transform_9(%arg0: i32) -> (i32, i32) {
    %c0_i32 = arith.constant 0 : i32
    %c0_i32_0 = arith.constant 0 : i32
    %c0_i32_1 = arith.constant 0 : i32
    return %c0_i32, %c0_i32_0 : i32, i32
  }
  func.func @transform_10(%arg0: i32) -> (i32, i32) {
    %c0_i32 = arith.constant 0 : i32
    %c0_i32_0 = arith.constant 0 : i32
    %c0_i32_1 = arith.constant 0 : i32
    return %c0_i32, %c0_i32_0 : i32, i32
  }
  func.func @transform_11(%arg0: i32) -> (i32, i32) {
    %c0_i32 = arith.constant 0 : i32
    %c0_i32_0 = arith.constant 0 : i32
    %c0_i32_1 = arith.constant 0 : i32
    return %c0_i32, %c0_i32_0 : i32, i32
  }
  func.func @transform_12(%arg0: i32) -> (i32, i32) {
    %c0_i32 = arith.constant 0 : i32
    %c0_i32_0 = arith.constant 0 : i32
    return %c0_i32, %arg0 : i32, i32
  }
  func.func @transform_13(%arg0: i32) -> (i32, i32) {
    %c0_i32 = arith.constant 0 : i32
    %c0_i32_0 = arith.constant 0 : i32
    return %c0_i32, %arg0 : i32, i32
  }
  func.func @transform_14(%arg0: i32) -> (i32, i32) {
    %c0_i32 = arith.constant 0 : i32
    %c0_i32_0 = arith.constant 0 : i32
    return %c0_i32, %arg0 : i32, i32
  }
  func.func @transform_15(%arg0: i32) -> (i32, i32) {
    %c0_i32 = arith.constant 0 : i32
    %c0_i32_0 = arith.constant 0 : i32
    %c0_i32_1 = arith.constant 0 : i32
    return %c0_i32, %c0_i32_0 : i32, i32
  }
  func.func @transform_16(%arg0: i32) -> (i32, i32) {
    %c0_i32 = arith.constant 0 : i32
    %c0_i32_0 = arith.constant 0 : i32
    %c0_i32_1 = arith.constant 0 : i32
    return %c0_i32, %c0_i32_0 : i32, i32
  }
}

</mosaic_0001>

<llo_original>
// kernel: tpu_custom_call.1
$region0: #{tpu_custom_call.1}
  #allocation0 [shape = 'u32[]', space=smem, size = 0x4, offset = 0x4, fixed_abs, tag = 'smem constant byte address 0x4 - core index']
  #allocation1 [shape = 'u32[72,128]{1,0:T(1,128)}', space=vmem, size = 0x9000, scoped, tag = 'internal scratch']
  #allocation2 [shape = 'f32[8,128]{1,0:T(8,128)}', space=vmem, size = 0x1000, scoped, tag = 'scratch operand']
  %s0 = inlined_call_operand.hbm [shape: f32[8,128], index: 0, kind: input, shape index: {}]
  %s1 = inlined_call_operand.hbm [shape: f32[8,128], index: 1, kind: input, shape index: {}]
  %s2 = inlined_call_operand.hbm [shape: f32[8,8,128], index: 2, kind: input, shape index: {}]
  %s3 = inlined_call_operand.hbm [shape: f32[128,384], index: 3, kind: input, shape index: {}]
  %s4 = inlined_call_operand.hbm [shape: f32[128,384], index: 4, kind: input, shape index: {}]
  %s5 = inlined_call_operand.vmem [shape: f32[1,384], index: 5, kind: input, shape index: {}]
  %s6 = inlined_call_operand.hbm [shape: f32[1,384], index: 6, kind: input, shape index: {}]
  %s7 = inlined_call_operand.hbm [shape: f32[128,128], index: 7, kind: input, shape index: {}]
  %s8 = inlined_call_operand.vmem [shape: f32[1,128], index: 8, kind: input, shape index: {}]
  %s9 = inlined_call_operand.hbm [shape: f32[128,128], index: 9, kind: input, shape index: {}]
  %s10 = inlined_call_operand.hbm [shape: f32[128,128], index: 10, kind: input, shape index: {}]
  %s11 = inlined_call_operand.vmem [shape: f32[1,128], index: 11, kind: input, shape index: {}]
  %s12 = inlined_call_operand.hbm [shape: f32[128,128], index: 12, kind: input, shape index: {}]
  %s13 = inlined_call_operand.vmem [shape: f32[1,128], index: 13, kind: input, shape index: {}]
  %s14 = inlined_call_operand.hbm [shape: f32[8,128], index: 14, kind: output, shape index: {0}]
  %s15 = inlined_call_operand.hbm [shape: f32[8,128], index: 15, kind: output, shape index: {1}]
  %s16 = inlined_call_operand.hbm [shape: f32[8,8], index: 16, kind: output, shape index: {2}]
  %17 = xla_tuple %s14, %s15, %s16
  %s18 = sld [smem:[#allocation0]]
  $region126: #{tpu_custom_call.1} parent=0
    _
  %s20 = ssub.s32 1, %s18
  %s21 = scalar_select 0, %s20, %s18
  $region1: #{tpu_custom_call.1} parent=0
    #allocation3 [shape = 'u8[4096]{0}', space=vmem, size = 0x1000, scoped, tag = 'input window, operand 0, single buffered']
    #allocation4 [shape = 's32[1]{0}', space=sflag, size = 0x4, scoped, tag = 'scoped memory for tpu_custom_call.1']
    #allocation5 [shape = 's32[1]{0}', space=sflag, size = 0x4, scoped, tag = 'scoped memory for tpu_custom_call.1']
    #allocation6 [shape = 'u8[4096]{0}', space=vmem, size = 0x1000, scoped, tag = 'input window, operand 1, single buffered']
    #allocation7 [shape = 's32[1]{0}', space=sflag, size = 0x4, scoped, tag = 'scoped memory for tpu_custom_call.1']
    #allocation8 [shape = 'u8[32768]{0}', space=vmem, size = 0x8000, scoped, tag = 'input window, operand 2, single buffered']
    #allocation9 [shape = 'u8[196608]{0}', space=vmem, size = 0x30000, scoped, tag = 'input window, operand 3, single buffered']
    #allocation10 [shape = 's32[1]{0}', space=sflag, size = 0x4, scoped, tag = 'scoped memory for tpu_custom_call.1']
    #allocation11 [shape = 'u8[196608]{0}', space=vmem, size = 0x30000, scoped, tag = 'input window, operand 4, single buffered']
    #allocation12 [shape = 'u8[1536]{0}', space=vmem, size = 0x800, scoped, tag = 'input window, operand 6, single buffered']
    #allocation13 [shape = 's32[1]{0}', space=sflag, size = 0x4, scoped, tag = 'scoped memory for tpu_custom_call.1']
    #allocation14 [shape = 'u8[65536]{0}', space=vmem, size = 0x10000, scoped, tag = 'input window, operand 7, single buffered']
    #allocation15 [shape = 'u8[65536]{0}', space=vmem, size = 0x10000, scoped, tag = 'input window, operand 9, single buffered']
    #allocation16 [shape = 's32[1]{0}', space=sflag, size = 0x4, scoped, tag = 'scoped memory for tpu_custom_call.1']
    #allocation17 [shape = 'u8[65536]{0}', space=vmem, size = 0x10000, scoped, tag = 'input window, operand 10, single buffered']
    #allocation18 [shape = 'u8[65536]{0}', space=vmem, size = 0x10000, scoped, tag = 'input window, operand 12, single buffered']
    #allocation19 [shape = 's32[1]{0}', space=sflag, size = 0x4, scoped, tag = 'scoped memory for tpu_custom_call.1']
    #allocation20 [shape = 'u8[4096]{0}', space=vmem, size = 0x1000, scoped, tag = 'output window, operand 0, single buffered']
    #allocation21 [shape = 'u8[4096]{0}', space=vmem, size = 0x1000, scoped, tag = 'output window, operand 1, single buffered']
    #allocation22 [shape = 's32[1]{0}', space=sflag, size = 0x4, scoped, tag = 'scoped memory for tpu_custom_call.1']
    #allocation23 [shape = 'u8[4096]{0}', space=vmem, size = 0x1000, scoped, tag = 'output window, operand 2, single buffered']
    %22 = vsyncpa [#allocation4], 0
    %23 = vsyncpa [#allocation7], 0
    %24 = vsyncpa [#allocation10], 0
    %25 = vsyncpa [#allocation13], 0
    %26 = vsyncpa [#allocation16], 0
    %27 = vsyncpa [#allocation19], 0
    %28 = vsyncpa [#allocation5], 0
    %29 = vsyncpa [#allocation22], 0
    // Predicated region
    $region2: #{tpu_custom_call.1} parent=1 // pred_check
      _
    $region3: #{tpu_custom_call.1} parent=1 // pred_check_branch
      %31 = sbr.rel (0) target = $region5
    $region4: #{tpu_custom_call.1} parent=1 // pred_region
      %33 = vsyncadd [#allocation4], 0
      %s35 = sshll.u32 %s0, 4
      %s36 = int_to_ptr.hbm [resolvable:$true] %s35
      %s37 = sshll.u32 [#allocation3], 4
      %s38 = int_to_ptr.vmem [resolvable:$true] %s37
      %40 = dma.hbm_to_vmem [thread:$0]  %s36, 128, %s38, [#allocation4]
    $region5: #{tpu_custom_call.1} parent=1 // pred_fallthru
      _
    // Predicated region
    $region6: #{tpu_custom_call.1} parent=1 // pred_check
      _
    $region7: #{tpu_custom_call.1} parent=1 // pred_check_branch
      %42 = sbr.rel (0) target = $region9
    $region8: #{tpu_custom_call.1} parent=1 // pred_region
      %44 = vsyncadd [#allocation7], 0
      %s46 = sshll.u32 %s1, 4
      %s47 = int_to_ptr.hbm [resolvable:$true] %s46
      %s48 = sshll.u32 [#allocation6], 4
      %s49 = int_to_ptr.vmem [resolvable:$true] %s48
      %51 = dma.hbm_to_vmem [thread:$0]  %s47, 128, %s49, [#allocation7]
    $region9: #{tpu_custom_call.1} parent=1 // pred_fallthru
      _
    // Predicated region
    $region10: #{tpu_custom_call.1} parent=1 // pred_check
      _
    $region11: #{tpu_custom_call.1} parent=1 // pred_check_branch
      %53 = sbr.rel (0) target = $region13
    $region12: #{tpu_custom_call.1} parent=1 // pred_region
      %55 = vsyncadd [#allocation7], 0
      %s56 = sshll.u32 %s2, 4
      %s57 = int_to_ptr.hbm [resolvable:$true] %s56
      %s58 = sshll.u32 [#allocation8], 4
      %s59 = int_to_ptr.vmem [resolvable:$true] %s58
      %64 = dma.hbm_to_vmem [thread:$0]  %s57, 1024, %s59, [#allocation7], 128, 128, 8
    $region13: #{tpu_custom_call.1} parent=1 // pred_fallthru
      _
    // Predicated region
    $region14: #{tpu_custom_call.1} parent=1 // pred_check
      _
    $region15: #{tpu_custom_call.1} parent=1 // pred_check_branch
      %66 = sbr.rel (0) target = $region17
    $region16: #{tpu_custom_call.1} parent=1 // pred_region
      %68 = vsyncadd [#allocation10], 0
      %s69 = sshll.u32 %s3, 4
      %s70 = int_to_ptr.hbm [resolvable:$true] %s69
      %s71 = sshll.u32 [#allocation9], 4
      %s72 = int_to_ptr.vmem [resolvable:$true] %s71
      %77 = dma.hbm_to_vmem [thread:$0]  %s70, 6144, %s72, [#allocation10], 384, 384, 24
    $region17: #{tpu_custom_call.1} parent=1 // pred_fallthru
      _
    // Predicated region
    $region18: #{tpu_custom_call.1} parent=1 // pred_check
      _
    $region19: #{tpu_custom_call.1} parent=1 // pred_check_branch
      %79 = sbr.rel (0) target = $region21
    $region20: #{tpu_custom_call.1} parent=1 // pred_region
      %81 = vsyncadd [#allocation10], 0
      %s82 = sshll.u32 %s4, 4
      %s83 = int_to_ptr.hbm [resolvable:$true] %s82
      %s84 = sshll.u32 [#allocation11], 4
      %s85 = int_to_ptr.vmem [resolvable:$true] %s84
      %90 = dma.hbm_to_vmem [thread:$0]  %s83, 6144, %s85, [#allocation10], 384, 384, 24
    $region21: #{tpu_custom_call.1} parent=1 // pred_fallthru
      _
    // Predicated region
    $region22: #{tpu_custom_call.1} parent=1 // pred_check
      _
    $region23: #{tpu_custom_call.1} parent=1 // pred_check_branch
      %92 = sbr.rel (0) target = $region25
    $region24: #{tpu_custom_call.1} parent=1 // pred_region
      _
    $region25: #{tpu_custom_call.1} parent=1 // pred_fallthru
      _
    // Predicated region
    $region26: #{tpu_custom_call.1} parent=1 // pred_check
      _
    $region27: #{tpu_custom_call.1} parent=1 // pred_check_branch
      %94 = sbr.rel (0) target = $region29
    $region28: #{tpu_custom_call.1} parent=1 // pred_region
      %96 = vsyncadd [#allocation13], 0
      %s98 = sshll.u32 %s6, 4
      %s99 = int_to_ptr.hbm [resolvable:$true] %s98
      %s100 = sshll.u32 [#allocation12], 4
      %s101 = int_to_ptr.vmem [resolvable:$true] %s100
      %103 = dma.hbm_to_vmem [thread:$0]  %s99, 48, %s101, [#allocation13]
    $region29: #{tpu_custom_call.1} parent=1 // pred_fallthru
      _
    // Predicated region
    $region30: #{tpu_custom_call.1} parent=1 // pred_check
      _
    $region31: #{tpu_custom_call.1} parent=1 // pred_check_branch
      %105 = sbr.rel (0) target = $region33
    $region32: #{tpu_custom_call.1} parent=1 // pred_region
      %107 = vsyncadd [#allocation13], 0
      %s108 = sshll.u32 %s7, 4
      %s109 = int_to_ptr.hbm [resolvable:$true] %s108
      %s110 = sshll.u32 [#allocation14], 4
      %s111 = int_to_ptr.vmem [resolvable:$true] %s110
      %116 = dma.hbm_to_vmem [thread:$0]  %s109, 2048, %s111, [#allocation13], 128, 128, 8
    $region33: #{tpu_custom_call.1} parent=1 // pred_fallthru
      _
    // Predicated region
    $region34: #{tpu_custom_call.1} parent=1 // pred_check
      _
    $region35: #{tpu_custom_call.1} parent=1 // pred_check_branch
      %118 = sbr.rel (0) target = $region37
    $region36: #{tpu_custom_call.1} parent=1 // pred_region
      _
    $region37: #{tpu_custom_call.1} parent=1 // pred_fallthru
      _
    // Predicated region
    $region38: #{tpu_custom_call.1} parent=1 // pred_check
      _
    $region39: #{tpu_custom_call.1} parent=1 // pred_check_branch
      %120 = sbr.rel (0) target = $region41
    $region40: #{tpu_custom_call.1} parent=1 // pred_region
      %122 = vsyncadd [#allocation16], 0
      %s123 = sshll.u32 %s9, 4
      %s124 = int_to_ptr.hbm [resolvable:$true] %s123
      %s125 = sshll.u32 [#allocation15], 4
      %s126 = int_to_ptr.vmem [resolvable:$true] %s125
      %131 = dma.hbm_to_vmem [thread:$0]  %s124, 2048, %s126, [#allocation16], 128, 128, 8
    $region41: #{tpu_custom_call.1} parent=1 // pred_fallthru
      _
    // Predicated region
    $region42: #{tpu_custom_call.1} parent=1 // pred_check
      _
    $region43: #{tpu_custom_call.1} parent=1 // pred_check_branch
      %133 = sbr.rel (0) target = $region45
    $region44: #{tpu_custom_call.1} parent=1 // pred_region
      %135 = vsyncadd [#allocation16], 0
      %s136 = sshll.u32 %s10, 4
      %s137 = int_to_ptr.hbm [resolvable:$true] %s136
      %s138 = sshll.u32 [#allocation17], 4
      %s139 = int_to_ptr.vmem [resolvable:$true] %s138
      %144 = dma.hbm_to_vmem [thread:$0]  %s137, 2048, %s139, [#allocation16], 128, 128, 8
    $region45: #{tpu_custom_call.1} parent=1 // pred_fallthru
      _
    // Predicated region
    $region46: #{tpu_custom_call.1} parent=1 // pred_check
      _
    $region47: #{tpu_custom_call.1} parent=1 // pred_check_branch
      %146 = sbr.rel (0) target = $region49
    $region48: #{tpu_custom_call.1} parent=1 // pred_region
      _
    $region49: #{tpu_custom_call.1} parent=1 // pred_fallthru
      _
    // Predicated region
    $region50: #{tpu_custom_call.1} parent=1 // pred_check
      _
    $region51: #{tpu_custom_call.1} parent=1 // pred_check_branch
      %148 = sbr.rel (0) target = $region53
    $region52: #{tpu_custom_call.1} parent=1 // pred_region
      %150 = vsyncadd [#allocation19], 0
      %s151 = sshll.u32 %s12, 4
      %s152 = int_to_ptr.hbm [resolvable:$true] %s151
      %s153 = sshll.u32 [#allocation18], 4
      %s154 = int_to_ptr.vmem [resolvable:$true] %s153
      %159 = dma.hbm_to_vmem [thread:$0]  %s152, 2048, %s154, [#allocation19], 128, 128, 8
    $region53: #{tpu_custom_call.1} parent=1 // pred_fallthru
      _
    // Predicated region
    $region54: #{tpu_custom_call.1} parent=1 // pred_check
      _
    $region55: #{tpu_custom_call.1} parent=1 // pred_check_branch
      %161 = sbr.rel (0) target = $region57
    $region56: #{tpu_custom_call.1} parent=1 // pred_region
      _
    $region57: #{tpu_custom_call.1} parent=1 // pred_fallthru
      _
    // Predicated region
    $region58: #{tpu_custom_call.1} parent=1 // pred_check
      _
    $region59: #{tpu_custom_call.1} parent=1 // pred_check_branch
      %163 = sbr.rel (0) target = $region61
    $region60: #{tpu_custom_call.1} parent=1 // pred_region
      %165 = dma.done [#allocation4], 128
    $region61: #{tpu_custom_call.1} parent=1 // pred_fallthru
      _
    // Predicated region
    $region62: #{tpu_custom_call.1} parent=1 // pred_check
      _
    $region63: #{tpu_custom_call.1} parent=1 // pred_check_branch
      %167 = sbr.rel (0) target = $region65
    $region64: #{tpu_custom_call.1} parent=1 // pred_region
      %169 = dma.done [#allocation7], 128
    $region65: #{tpu_custom_call.1} parent=1 // pred_fallthru
      _
    // Predicated region
    $region66: #{tpu_custom_call.1} parent=1 // pred_check
      _
    $region67: #{tpu_custom_call.1} parent=1 // pred_check_branch
      %171 = sbr.rel (0) target = $region69
    $region68: #{tpu_custom_call.1} parent=1 // pred_region
      %173 = dma.done [#allocation7], 1024
    $region69: #{tpu_custom_call.1} parent=1 // pred_fallthru
      _
    // Predicated region
    $region70: #{tpu_custom_call.1} parent=1 // pred_check
      _
    $region71: #{tpu_custom_call.1} parent=1 // pred_check_branch
      %175 = sbr.rel (0) target = $region73
    $region72: #{tpu_custom_call.1} parent=1 // pred_region
      %177 = dma.done [#allocation10], 6144
    $region73: #{tpu_custom_call.1} parent=1 // pred_fallthru
      _
    // Predicated region
    $region74: #{tpu_custom_call.1} parent=1 // pred_check
      _
    $region75: #{tpu_custom_call.1} parent=1 // pred_check_branch
      %179 = sbr.rel (0) target = $region77
    $region76: #{tpu_custom_call.1} parent=1 // pred_region
      %181 = dma.done [#allocation10], 6144
    $region77: #{tpu_custom_call.1} parent=1 // pred_fallthru
      _
    // Predicated region
    $region78: #{tpu_custom_call.1} parent=1 // pred_check
      _
    $region79: #{tpu_custom_call.1} parent=1 // pred_check_branch
      %183 = sbr.rel (0) target = $region81
    $region80: #{tpu_custom_call.1} parent=1 // pred_region
      %185 = dma.done [#allocation13], 48
    $region81: #{tpu_custom_call.1} parent=1 // pred_fallthru
      _
    // Predicated region
    $region82: #{tpu_custom_call.1} parent=1 // pred_check
      _
    $region83: #{tpu_custom_call.1} parent=1 // pred_check_branch
      %187 = sbr.rel (0) target = $region85
    $region84: #{tpu_custom_call.1} parent=1 // pred_region
      %189 = dma.done [#allocation13], 2048
    $region85: #{tpu_custom_call.1} parent=1 // pred_fallthru
      _
    // Predicated region
    $region86: #{tpu_custom_call.1} parent=1 // pred_check
      _
    $region87: #{tpu_custom_call.1} parent=1 // pred_check_branch
      %191 = sbr.rel (0) target = $region89
    $region88: #{tpu_custom_call.1} parent=1 // pred_region
      %193 = dma.done [#allocation16], 2048
    $region89: #{tpu_custom_call.1} parent=1 // pred_fallthru
      _
    // Predicated region
    $region90: #{tpu_custom_call.1} parent=1 // pred_check
      _
    $region91: #{tpu_custom_call.1} parent=1 // pred_check_branch
      %195 = sbr.rel (0) target = $region93
    $region92: #{tpu_custom_call.1} parent=1 // pred_region
      %197 = dma.done [#allocation16], 2048
    $region93: #{tpu_custom_call.1} parent=1 // pred_fallthru
      _
    // Predicated region
    $region94: #{tpu_custom_call.1} parent=1 // pred_check
      _
    $region95: #{tpu_custom_call.1} parent=1 // pred_check_branch
      %199 = sbr.rel (0) target = $region97
    $region96: #{tpu_custom_call.1} parent=1 // pred_region
      %201 = dma.done [#allocation19], 2048
    $region97: #{tpu_custom_call.1} parent=1 // pred_fallthru
      _
    %p202 = scmp.eq.s32.totalorder 0, 0
    // Predicated region
    $region98: #{tpu_custom_call.1} parent=1 // pred_check
      %p203 = pneg %p202
    $region99: #{tpu_custom_call.1} parent=1 // pred_check_branch
      %205 = sbr.rel (%p203) target = $region101
    $region100: #{tpu_custom_call.1} parent=1 // pred_region
      %v206 = vld [vmem:[#allocation3] sm:$0xff]
      %v207 = vld [vmem:[#allocation6] sm:$0xff]
      %v208 = vld [vmem:[#allocation9] sm:$0xff]
      %v209 = vld [vmem:[#allocation9 + $0x18] sm:$0xff]
      %v210 = vld [vmem:[#allocation9 + $0x30] sm:$0xff]
      %v211 = vld [vmem:[#allocation9 + $0x48] sm:$0xff]
      %v212 = vld [vmem:[#allocation9 + $0x60] sm:$0xff]
      %v213 = vld [vmem:[#allocation9 + $0x78] sm:$0xff]
      %v214 = vld [vmem:[#allocation9 + $0x90] sm:$0xff]
      %v215 = vld [vmem:[#allocation9 + $0xa8] sm:$0xff]
      %v216 = vld [vmem:[#allocation9 + $0xc0] sm:$0xff]
      %v217 = vld [vmem:[#allocation9 + $0xd8] sm:$0xff]
      %v218 = vld [vmem:[#allocation9 + $0xf0] sm:$0xff]
      %v219 = vld [vmem:[#allocation9 + $0x108] sm:$0xff]
      %v220 = vld [vmem:[#allocation9 + $0x120] sm:$0xff]
      %v221 = vld [vmem:[#allocation9 + $0x138] sm:$0xff]
      %v222 = vld [vmem:[#allocation9 + $0x150] sm:$0xff]
      %v223 = vld [vmem:[#allocation9 + $0x168] sm:$0xff]
      %v224 = vld [vmem:[%s5] sm:$0x1]
      %v226 = vperm.slane %v224, 0
      %228 = vmatpush.msra.mxu0 %v223
      %229 = vmatpush.msra.mxu0 %v222
      %230 = vmatpush.msra.mxu0 %v221
      %231 = vmatpush.msra.mxu0 %v220
      %232 = vmatpush.msra.mxu0 %v219
      %233 = vmatpush.msra.mxu0 %v218
      %234 = vmatpush.msra.mxu0 %v217
      %235 = vmatpush.msra.mxu0 %v216
      %236 = vmatpush.msra.mxu0 %v215
      %237 = vmatpush.msra.mxu0 %v214
      %238 = vmatpush.msra.mxu0 %v213
      %239 = vmatpush.msra.mxu0 %v212
      %240 = vmatpush.msra.mxu0 %v211
      %241 = vmatpush.msra.mxu0 %v210
      %242 = vmatpush.msra.mxu0 %v209
      %243 = vmatpush.msra.mxu0 %v208
      %244 = vmatmul.f32.gmra.mxu0 %v206
      %v245 = vpop.f32.mrf.mxu0
      %v246 = vadd.f32 %v226, %v245
      %247 = vdwg.mxu0
      %v248 = vld [vmem:[#allocation11] sm:$0xff]
      %v249 = vld [vmem:[#allocation11 + $0x18] sm:$0xff]
      %v250 = vld [vmem:[#allocation11 + $0x30] sm:$0xff]
      %v251 = vld [vmem:[#allocation11 + $0x48] sm:$0xff]
      %v252 = vld [vmem:[#allocation11 + $0x60] sm:$0xff]
      %v253 = vld [vmem:[#allocation11 + $0x78] sm:$0xff]
      %v254 = vld [vmem:[#allocation11 + $0x90] sm:$0xff]
      %v255 = vld [vmem:[#allocation11 + $0xa8] sm:$0xff]
      %v256 = vld [vmem:[#allocation11 + $0xc0] sm:$0xff]
      %v257 = vld [vmem:[#allocation11 + $0xd8] sm:$0xff]
      %v258 = vld [vmem:[#allocation11 + $0xf0] sm:$0xff]
      %v259 = vld [vmem:[#allocation11 + $0x108] sm:$0xff]
      %v260 = vld [vmem:[#allocation11 + $0x120] sm:$0xff]
      %v261 = vld [vmem:[#allocation11 + $0x138] sm:$0xff]
      %v262 = vld [vmem:[#allocation11 + $0x150] sm:$0xff]
      %v263 = vld [vmem:[#allocation11 + $0x168] sm:$0xff]
      %v264 = vld [vmem:[#allocation12] sm:$0x1]
      %v266 = vperm.slane %v264, 0
      %268 = vmatpush.msra.mxu0 %v263
      %269 = vmatpush.msra.mxu0 %v262
      %270 = vmatpush.msra.mxu0 %v261
      %271 = vmatpush.msra.mxu0 %v260
      %272 = vmatpush.msra.mxu0 %v259
      %273 = vmatpush.msra.mxu0 %v258
      %274 = vmatpush.msra.mxu0 %v257
      %275 = vmatpush.msra.mxu0 %v256
      %276 = vmatpush.msra.mxu0 %v255
      %277 = vmatpush.msra.mxu0 %v254
      %278 = vmatpush.msra.mxu0 %v253
      %279 = vmatpush.msra.mxu0 %v252
      %280 = vmatpush.msra.mxu0 %v251
      %281 = vmatpush.msra.mxu0 %v250
      %282 = vmatpush.msra.mxu0 %v249
      %283 = vmatpush.msra.mxu0 %v248
      %284 = vmatmul.f32.gmra.mxu0 %v207
      %v285 = vpop.f32.mrf.mxu0
      %v286 = vadd.f32 %v266, %v285
      %287 = vdwg.mxu0
      %v288 = vadd.f32 %v246, %v286
      %v289 = vxor.u32 %v288, 2147483648
      %v290 = vmul.f32 %v289, 1.442695
      %v291 = vpow.pop %v290
      %v292 = vadd.f32 %v291, 1.0
      %v293 = vrcp.pop %v292
      %v294 = vmul.f32 %v292, %v293
      %v295 = vsub.f32 1.0, %v294
      %v296 = vmul.f32 %v293, %v295
      %v297 = vadd.f32 %v293, %v296
      %vm298 = vweird.f32 %v292
      %vm299 = vweird.f32 %v293
      %vm300 = vmor %vm298, %vm299
      %v301 = vsel %vm300, %v293, %v297
      %v302 = vand.u32 2147483647, %v292
      %vm303 = vcmp.eq.f32.partialorder %v302, 8.507059e+37
      %v304 = vand.u32 %v292, 2147483648
      %v305 = vor.u32 1.1754944e-38, %v304
      %v306 = vsel %vm303, %v305, %v301
      %v307 = vmul.f32 1.0, %v306
      %v308 = vld [vmem:[#allocation9 + $0x8] sm:$0xff]
      %v309 = vld [vmem:[#allocation9 + $0x20] sm:$0xff]
      %v310 = vld [vmem:[#allocation9 + $0x38] sm:$0xff]
      %v311 = vld [vmem:[#allocation9 + $0x50] sm:$0xff]
      %v312 = vld [vmem:[#allocation9 + $0x68] sm:$0xff]
      %v313 = vld [vmem:[#allocation9 + $0x80] sm:$0xff]
      %v314 = vld [vmem:[#allocation9 + $0x98] sm:$0xff]
      %v315 = vld [vmem:[#allocation9 + $0xb0] sm:$0xff]
      %v316 = vld [vmem:[#allocation9 + $0xc8] sm:$0xff]
      %v317 = vld [vmem:[#allocation9 + $0xe0] sm:$0xff]
      %v318 = vld [vmem:[#allocation9 + $0xf8] sm:$0xff]
      %v319 = vld [vmem:[#allocation9 + $0x110] sm:$0xff]
      %v320 = vld [vmem:[#allocation9 + $0x128] sm:$0xff]
      %v321 = vld [vmem:[#allocation9 + $0x140] sm:$0xff]
      %v322 = vld [vmem:[#allocation9 + $0x158] sm:$0xff]
      %v323 = vld [vmem:[#allocation9 + $0x170] sm:$0xff]
      %v324 = vld [vmem:[%s5 + $0x1] sm:$0x1]
      %v326 = vperm.slane %v324, 0
      %328 = vmatpush.msra.mxu0 %v323
      %329 = vmatpush.msra.mxu0 %v322
      %330 = vmatpush.msra.mxu0 %v321
      %331 = vmatpush.msra.mxu0 %v320
      %332 = vmatpush.msra.mxu0 %v319
      %333 = vmatpush.msra.mxu0 %v318
      %334 = vmatpush.msra.mxu0 %v317
      %335 = vmatpush.msra.mxu0 %v316
      %336 = vmatpush.msra.mxu0 %v315
      %337 = vmatpush.msra.mxu0 %v314
      %338 = vmatpush.msra.mxu0 %v313
      %339 = vmatpush.msra.mxu0 %v312
      %340 = vmatpush.msra.mxu0 %v311
      %341 = vmatpush.msra.mxu0 %v310
      %342 = vmatpush.msra.mxu0 %v309
      %343 = vmatpush.msra.mxu0 %v308
      %344 = vmatmul.f32.gmra.mxu0 %v206
      %v345 = vpop.f32.mrf.mxu0
      %v346 = vadd.f32 %v326, %v345
      %347 = vdwg.mxu0
      %v348 = vld [vmem:[#allocation11 + $0x8] sm:$0xff]
      %v349 = vld [vmem:[#allocation11 + $0x20] sm:$0xff]
      %v350 = vld [vmem:[#allocation11 + $0x38] sm:$0xff]
      %v351 = vld [vmem:[#allocation11 + $0x50] sm:$0xff]
      %v352 = vld [vmem:[#allocation11 + $0x68] sm:$0xff]
      %v353 = vld [vmem:[#allocation11 + $0x80] sm:$0xff]
      %v354 = vld [vmem:[#allocation11 + $0x98] sm:$0xff]
      %v355 = vld [vmem:[#allocation11 + $0xb0] sm:$0xff]
      %v356 = vld [vmem:[#allocation11 + $0xc8] sm:$0xff]
      %v357 = vld [vmem:[#allocation11 + $0xe0] sm:$0xff]
      %v358 = vld [vmem:[#allocation11 + $0xf8] sm:$0xff]
      %v359 = vld [vmem:[#allocation11 + $0x110] sm:$0xff]
      %v360 = vld [vmem:[#allocation11 + $0x128] sm:$0xff]
      %v361 = vld [vmem:[#allocation11 + $0x140] sm:$0xff]
      %v362 = vld [vmem:[#allocation11 + $0x158] sm:$0xff]
      %v363 = vld [vmem:[#allocation11 + $0x170] sm:$0xff]
      %v364 = vld [vmem:[#allocation12 + $0x1] sm:$0x1]
      %v366 = vperm.slane %v364, 0
      %368 = vmatpush.msra.mxu0 %v363
      %369 = vmatpush.msra.mxu0 %v362
      %370 = vmatpush.msra.mxu0 %v361
      %371 = vmatpush.msra.mxu0 %v360
      %372 = vmatpush.msra.mxu0 %v359
      %373 = vmatpush.msra.mxu0 %v358
      %374 = vmatpush.msra.mxu0 %v357
      %375 = vmatpush.msra.mxu0 %v356
      %376 = vmatpush.msra.mxu0 %v355
      %377 = vmatpush.msra.mxu0 %v354
      %378 = vmatpush.msra.mxu0 %v353
      %379 = vmatpush.msra.mxu0 %v352
      %380 = vmatpush.msra.mxu0 %v351
      %381 = vmatpush.msra.mxu0 %v350
      %382 = vmatpush.msra.mxu0 %v349
      %383 = vmatpush.msra.mxu0 %v348
      %384 = vmatmul.f32.gmra.mxu0 %v207
      %v385 = vpop.f32.mrf.mxu0
      %v386 = vadd.f32 %v366, %v385
      %387 = vdwg.mxu0
      %v388 = vadd.f32 %v346, %v386
      %v389 = vxor.u32 %v388, 2147483648
      %v390 = vmul.f32 %v389, 1.442695
      %v391 = vpow.pop %v390
      %v392 = vadd.f32 %v391, 1.0
      %v393 = vrcp.pop %v392
      %v394 = vmul.f32 %v392, %v393
      %v395 = vsub.f32 1.0, %v394
      %v396 = vmul.f32 %v393, %v395
      %v397 = vadd.f32 %v393, %v396
      %vm398 = vweird.f32 %v392
      %vm399 = vweird.f32 %v393
      %vm400 = vmor %vm398, %vm399
      %v401 = vsel %vm400, %v393, %v397
      %v402 = vand.u32 2147483647, %v392
      %vm403 = vcmp.eq.f32.partialorder %v402, 8.507059e+37
      %v404 = vand.u32 %v392, 2147483648
      %v405 = vor.u32 1.1754944e-38, %v404
      %v406 = vsel %vm403, %v405, %v401
      %v407 = vmul.f32 1.0, %v406
      %v408 = vld [vmem:[#allocation9 + $0x10] sm:$0xff]
      %v409 = vld [vmem:[#allocation9 + $0x28] sm:$0xff]
      %v410 = vld [vmem:[#allocation9 + $0x40] sm:$0xff]
      %v411 = vld [vmem:[#allocation9 + $0x58] sm:$0xff]
      %v412 = vld [vmem:[#allocation9 + $0x70] sm:$0xff]
      %v413 = vld [vmem:[#allocation9 + $0x88] sm:$0xff]
      %v414 = vld [vmem:[#allocation9 + $0xa0] sm:$0xff]
      %v415 = vld [vmem:[#allocation9 + $0xb8] sm:$0xff]
      %v416 = vld [vmem:[#allocation9 + $0xd0] sm:$0xff]
      %v417 = vld [vmem:[#allocation9 + $0xe8] sm:$0xff]
      %v418 = vld [vmem:[#allocation9 + $0x100] sm:$0xff]
      %v419 = vld [vmem:[#allocation9 + $0x118] sm:$0xff]
      %v420 = vld [vmem:[#allocation9 + $0x130] sm:$0xff]
      %v421 = vld [vmem:[#allocation9 + $0x148] sm:$0xff]
      %v422 = vld [vmem:[#allocation9 + $0x160] sm:$0xff]
      %v423 = vld [vmem:[#allocation9 + $0x178] sm:$0xff]
      %v424 = vld [vmem:[%s5 + $0x2] sm:$0x1]
      %v426 = vperm.slane %v424, 0
      %428 = vmatpush.msra.mxu0 %v423
      %429 = vmatpush.msra.mxu0 %v422
      %430 = vmatpush.msra.mxu0 %v421
      %431 = vmatpush.msra.mxu0 %v420
      %432 = vmatpush.msra.mxu0 %v419
      %433 = vmatpush.msra.mxu0 %v418
      %434 = vmatpush.msra.mxu0 %v417
      %435 = vmatpush.msra.mxu0 %v416
      %436 = vmatpush.msra.mxu0 %v415
      %437 = vmatpush.msra.mxu0 %v414
      %438 = vmatpush.msra.mxu0 %v413
      %439 = vmatpush.msra.mxu0 %v412
      %440 = vmatpush.msra.mxu0 %v411
      %441 = vmatpush.msra.mxu0 %v410
      %442 = vmatpush.msra.mxu0 %v409
      %443 = vmatpush.msra.mxu0 %v408
      %444 = vmatmul.f32.gmra.mxu0 %v206
      %v445 = vpop.f32.mrf.mxu0
      %v446 = vadd.f32 %v426, %v445
      %447 = vdwg.mxu0
      %v448 = vld [vmem:[#allocation11 + $0x10] sm:$0xff]
      %v449 = vld [vmem:[#allocation11 + $0x28] sm:$0xff]
      %v450 = vld [vmem:[#allocation11 + $0x40] sm:$0xff]
      %v451 = vld [vmem:[#allocation11 + $0x58] sm:$0xff]
      %v452 = vld [vmem:[#allocation11 + $0x70] sm:$0xff]
      %v453 = vld [vmem:[#allocation11 + $0x88] sm:$0xff]
      %v454 = vld [vmem:[#allocation11 + $0xa0] sm:$0xff]
      %v455 = vld [vmem:[#allocation11 + $0xb8] sm:$0xff]
      %v456 = vld [vmem:[#allocation11 + $0xd0] sm:$0xff]
      %v457 = vld [vmem:[#allocation11 + $0xe8] sm:$0xff]
      %v458 = vld [vmem:[#allocation11 + $0x100] sm:$0xff]
      %v459 = vld [vmem:[#allocation11 + $0x118] sm:$0xff]
      %v460 = vld [vmem:[#allocation11 + $0x130] sm:$0xff]
      %v461 = vld [vmem:[#allocation11 + $0x148] sm:$0xff]
      %v462 = vld [vmem:[#allocation11 + $0x160] sm:$0xff]
      %v463 = vld [vmem:[#allocation11 + $0x178] sm:$0xff]
      %v464 = vld [vmem:[#allocation12 + $0x2] sm:$0x1]
      %v466 = vperm.slane %v464, 0
      %468 = vmatpush.msra.mxu0 %v463
      %469 = vmatpush.msra.mxu0 %v462
      %470 = vmatpush.msra.mxu0 %v461
      %471 = vmatpush.msra.mxu0 %v460
      %472 = vmatpush.msra.mxu0 %v459
      %473 = vmatpush.msra.mxu0 %v458
      %474 = vmatpush.msra.mxu0 %v457
      %475 = vmatpush.msra.mxu0 %v456
      %476 = vmatpush.msra.mxu0 %v455
      %477 = vmatpush.msra.mxu0 %v454
      %478 = vmatpush.msra.mxu0 %v453
      %479 = vmatpush.msra.mxu0 %v452
      %480 = vmatpush.msra.mxu0 %v451
      %481 = vmatpush.msra.mxu0 %v450
      %482 = vmatpush.msra.mxu0 %v449
      %483 = vmatpush.msra.mxu0 %v448
      %484 = vmatmul.f32.gmra.mxu0 %v207
      %v485 = vpop.f32.mrf.mxu0
      %v486 = vadd.f32 %v466, %v485
      %487 = vdwg.mxu0
      %v488 = vmul.f32 %v307, %v486
      %v489 = vadd.f32 %v446, %v488
      %v490 = vtanh.pop %v489
      %v491 = vsub.f32 1.0, %v407
      %v492 = vmul.f32 %v491, %v490
      %v493 = vmul.f32 %v407, %v207
      %v494 = vadd.f32 %v492, %v493
      %v495 = vld [vmem:[#allocation8] sm:$0xff]
      %v496 = vld [vmem:[#allocation8 + $0x8] sm:$0xff]
      %v497 = vld [vmem:[#allocation8 + $0x10] sm:$0xff]
      %v498 = vld [vmem:[#allocation8 + $0x18] sm:$0xff]
      %v499 = vld [vmem:[#allocation8 + $0x20] sm:$0xff]
      %v500 = vld [vmem:[#allocation8 + $0x28] sm:$0xff]
      %v501 = vld [vmem:[#allocation8 + $0x30] sm:$0xff]
      %v502 = vld [vmem:[#allocation8 + $0x38] sm:$0xff]
      %v503 = vld [vmem:[#allocation14] sm:$0xff]
      %v504 = vld [vmem:[#allocation14 + $0x8] sm:$0xff]
      %v505 = vld [vmem:[#allocation14 + $0x10] sm:$0xff]
      %v506 = vld [vmem:[#allocation14 + $0x18] sm:$0xff]
      %v507 = vld [vmem:[#allocation14 + $0x20] sm:$0xff]
      %v508 = vld [vmem:[#allocation14 + $0x28] sm:$0xff]
      %v509 = vld [vmem:[#allocation14 + $0x30] sm:$0xff]
      %v510 = vld [vmem:[#allocation14 + $0x38] sm:$0xff]
      %v511 = vld [vmem:[#allocation14 + $0x40] sm:$0xff]
      %v512 = vld [vmem:[#allocation14 + $0x48] sm:$0xff]
      %v513 = vld [vmem:[#allocation14 + $0x50] sm:$0xff]
      %v514 = vld [vmem:[#allocation14 + $0x58] sm:$0xff]
      %v515 = vld [vmem:[#allocation14 + $0x60] sm:$0xff]
      %v516 = vld [vmem:[#allocation14 + $0x68] sm:$0xff]
      %v517 = vld [vmem:[#allocation14 + $0x70] sm:$0xff]
      %v518 = vld [vmem:[#allocation14 + $0x78] sm:$0xff]
      %519 = vmatpush.msra.mxu0 %v518
      %520 = vmatpush.msra.mxu0 %v517
      %521 = vmatpush.msra.mxu0 %v516
      %522 = vmatpush.msra.mxu0 %v515
      %523 = vmatpush.msra.mxu0 %v514
      %524 = vmatpush.msra.mxu0 %v513
      %525 = vmatpush.msra.mxu0 %v512
      %526 = vmatpush.msra.mxu0 %v511
      %527 = vmatpush.msra.mxu0 %v510
      %528 = vmatpush.msra.mxu0 %v509
      %529 = vmatpush.msra.mxu0 %v508
      %530 = vmatpush.msra.mxu0 %v507
      %531 = vmatpush.msra.mxu0 %v506
      %532 = vmatpush.msra.mxu0 %v505
      %533 = vmatpush.msra.mxu0 %v504
      %534 = vmatpush.msra.mxu0 %v503
      %535 = vmatmul.f32.gmra.mxu0 %v494
      %v536 = vpop.f32.mrf.mxu0
      %v537 = vadd.f32 0.0, %v536
      %538 = vdwg.mxu0
      %v539 = vld [vmem:[%s8] sm:$0x1]
      %v541 = vperm.slane %v539, 0
      %v543 = vmul.f32 %v494, %v541
      %544 = vadd.xlane.f32.xlu0 %v543
      %v545 = vpop.xlane.xlu0 %544
      %v547 = vrot.slane %v537, 1
      %v548 = vrot.slane %v537, 2
      %v549 = vrot.slane %v537, 3
      %v550 = vrot.slane %v537, 4
      %v551 = vrot.slane %v537, 5
      %v552 = vrot.slane %v537, 6
      %v553 = vrot.slane %v537, 7
      %v554 = vperm.slane %v537, 0
      %v555 = vperm.slane %v547, 0
      %v556 = vperm.slane %v548, 0
      %v557 = vperm.slane %v549, 0
      %v558 = vperm.slane %v550, 0
      %v559 = vperm.slane %v551, 0
      %v560 = vperm.slane %v552, 0
      %v561 = vperm.slane %v553, 0
      %v570 = vmul.f32 %v554, %v495
      %v571 = vmul.f32 %v555, %v496
      %v572 = vmul.f32 %v556, %v497
      %v573 = vmul.f32 %v557, %v498
      %v574 = vmul.f32 %v558, %v499
      %v575 = vmul.f32 %v559, %v500
      %v576 = vmul.f32 %v560, %v501
      %v577 = vmul.f32 %v561, %v502
      %578 = vadd.xlane.f32.xlu0 %v570
      %v579 = vpop.xlane.xlu0 %578
      %580 = vadd.xlane.f32.xlu0 %v571
      %v581 = vpop.xlane.xlu0 %580
      %582 = vadd.xlane.f32.xlu0 %v572
      %v583 = vpop.xlane.xlu0 %582
      %584 = vadd.xlane.f32.xlu0 %v573
      %v585 = vpop.xlane.xlu0 %584
      %586 = vadd.xlane.f32.xlu0 %v574
      %v587 = vpop.xlane.xlu0 %586
      %588 = vadd.xlane.f32.xlu0 %v575
      %v589 = vpop.xlane.xlu0 %588
      %590 = vadd.xlane.f32.xlu0 %v576
      %v591 = vpop.xlane.xlu0 %590
      %592 = vadd.xlane.f32.xlu0 %v577
      %v593 = vpop.xlane.xlu0 %592
      %v595 = vperm.slane %v545, 0
      %v596 = vperm.slane %v545, 1
      %v597 = vperm.slane %v545, 2
      %v598 = vperm.slane %v545, 3
      %v599 = vperm.slane %v545, 4
      %v600 = vperm.slane %v545, 5
      %v601 = vperm.slane %v545, 6
      %v602 = vperm.slane %v545, 7
      %v611 = vadd.f32 %v579, %v595
      %v612 = vadd.f32 %v581, %v596
      %v613 = vadd.f32 %v583, %v597
      %v614 = vadd.f32 %v585, %v598
      %v615 = vadd.f32 %v587, %v599
      %v616 = vadd.f32 %v589, %v600
      %v617 = vadd.f32 %v591, %v601
      %v618 = vadd.f32 %v593, %v602
      %627 = vset.pattern.permute.xlu0 0
      %628 = vperm.xlu0 %627, %v611
      %v629 = vpop.permute.xlu0 %628
      %630 = vset.pattern.permute.xlu0 0
      %631 = vperm.xlu0 %630, %v612
      %v632 = vpop.permute.xlu0 %631
      %633 = vset.pattern.permute.xlu0 0
      %634 = vperm.xlu0 %633, %v613
      %v635 = vpop.permute.xlu0 %634
      %636 = vset.pattern.permute.xlu0 0
      %637 = vperm.xlu0 %636, %v614
      %v638 = vpop.permute.xlu0 %637
      %639 = vset.pattern.permute.xlu0 0
      %640 = vperm.xlu0 %639, %v615
      %v641 = vpop.permute.xlu0 %640
      %642 = vset.pattern.permute.xlu0 0
      %643 = vperm.xlu0 %642, %v616
      %v644 = vpop.permute.xlu0 %643
      %645 = vset.pattern.permute.xlu0 0
      %646 = vperm.xlu0 %645, %v617
      %v647 = vpop.permute.xlu0 %646
      %648 = vset.pattern.permute.xlu0 0
      %649 = vperm.xlu0 %648, %v618
      %v650 = vpop.permute.xlu0 %649
      %v651 = vlaneseq
      %v652 = vand.u32 %v651, 127
      %v653 = vperm.slane %v629, %v652
      %v654 = vperm.slane %v632, %v652
      %v655 = vperm.slane %v635, %v652
      %v656 = vperm.slane %v638, %v652
      %v657 = vperm.slane %v641, %v652
      %v658 = vperm.slane %v644, %v652
      %v659 = vperm.slane %v647, %v652
      %v660 = vperm.slane %v650, %v652
      %vm661 = vcmask 1041409
      %v662 = vsel %vm661, %v654, %v653
      %vm663 = vcmask 1042434
      %v664 = vsel %vm663, %v655, %v662
      %vm665 = vcmask 1043459
      %v666 = vsel %vm665, %v656, %v664
      %vm667 = vcmask 1044484
      %v668 = vsel %vm667, %v657, %v666
      %vm669 = vcmask 1045509
      %v670 = vsel %vm669, %v658, %v668
      %vm671 = vcmask 1046534
      %v672 = vsel %vm671, %v659, %v670
      %vm673 = vcmask 1047559
      %v674 = vsel %vm673, %v660, %v672
      %vm676 = vcmask 64512
      %v677 = vsel %vm676, %v674, -inf
      %678 = vmax.xlane.f32.xlu0 %v677
      %v679 = vpop.xlane.xlu0 %678
      %v681 = vperm.slane %v679, 0
      %v682 = vperm.slane %v679, 1
      %v683 = vperm.slane %v679, 2
      %v684 = vperm.slane %v679, 3
      %v685 = vperm.slane %v679, 4
      %v686 = vperm.slane %v679, 5
      %v687 = vperm.slane %v679, 6
      %v688 = vperm.slane %v679, 7
      %v697 = vsub.f32 %v611, %v681
      %v698 = vsub.f32 %v612, %v682
      %v699 = vsub.f32 %v613, %v683
      %v700 = vsub.f32 %v614, %v684
      %v701 = vsub.f32 %v615, %v685
      %v702 = vsub.f32 %v616, %v686
      %v703 = vsub.f32 %v617, %v687
      %v704 = vsub.f32 %v618, %v688
      %v705 = vmul.f32 %v697, 1.442695
      %v706 = vpow.pop %v705
      %v707 = vmul.f32 %v698, 1.442695
      %v708 = vpow.pop %v707
      %v709 = vmul.f32 %v699, 1.442695
      %v710 = vpow.pop %v709
      %v711 = vmul.f32 %v700, 1.442695
      %v712 = vpow.pop %v711
      %v713 = vmul.f32 %v701, 1.442695
      %v714 = vpow.pop %v713
      %v715 = vmul.f32 %v702, 1.442695
      %v716 = vpow.pop %v715
      %v717 = vmul.f32 %v703, 1.442695
      %v718 = vpow.pop %v717
      %v719 = vmul.f32 %v704, 1.442695
      %v720 = vpow.pop %v719
      %729 = vset.pattern.permute.xlu0 0
      %730 = vperm.xlu0 %729, %v706
      %v731 = vpop.permute.xlu0 %730
      %732 = vset.pattern.permute.xlu0 0
      %733 = vperm.xlu0 %732, %v708
      %v734 = vpop.permute.xlu0 %733
      %735 = vset.pattern.permute.xlu0 0
      %736 = vperm.xlu0 %735, %v710
      %v737 = vpop.permute.xlu0 %736
      %738 = vset.pattern.permute.xlu0 0
      %739 = vperm.xlu0 %738, %v712
      %v740 = vpop.permute.xlu0 %739
      %741 = vset.pattern.permute.xlu0 0
      %742 = vperm.xlu0 %741, %v714
      %v743 = vpop.permute.xlu0 %742
      %744 = vset.pattern.permute.xlu0 0
      %745 = vperm.xlu0 %744, %v716
      %v746 = vpop.permute.xlu0 %745
      %747 = vset.pattern.permute.xlu0 0
      %748 = vperm.xlu0 %747, %v718
      %v749 = vpop.permute.xlu0 %748
      %750 = vset.pattern.permute.xlu0 0
      %751 = vperm.xlu0 %750, %v720
      %v752 = vpop.permute.xlu0 %751
      %v753 = vperm.slane %v731, %v652
      %v754 = vperm.slane %v734, %v652
      %v755 = vperm.slane %v737, %v652
      %v756 = vperm.slane %v740, %v652
      %v757 = vperm.slane %v743, %v652
      %v758 = vperm.slane %v746, %v652
      %v759 = vperm.slane %v749, %v652
      %v760 = vperm.slane %v752, %v652
      %v761 = vsel %vm661, %v754, %v753
      %v762 = vsel %vm663, %v755, %v761
      %v763 = vsel %vm665, %v756, %v762
      %v764 = vsel %vm667, %v757, %v763
      %v765 = vsel %vm669, %v758, %v764
      %v766 = vsel %vm671, %v759, %v765
      %v767 = vsel %vm673, %v760, %v766
      %v769 = vsel %vm676, %v767, 0.0
      %770 = vadd.xlane.f32.xlu0 %v769
      %v771 = vpop.xlane.xlu0 %770
      %v772 = vrcp.pop %v771
      %v773 = vmul.f32 %v771, %v772
      %v774 = vsub.f32 1.0, %v773
      %v775 = vmul.f32 %v772, %v774
      %v776 = vadd.f32 %v772, %v775
      %vm777 = vweird.f32 %v771
      %vm778 = vweird.f32 %v772
      %vm779 = vmor %vm777, %vm778
      %v780 = vsel %vm779, %v772, %v776
      %v781 = vand.u32 2147483647, %v771
      %vm782 = vcmp.eq.f32.partialorder %v781, 8.507059e+37
      %v783 = vand.u32 %v771, 2147483648
      %v784 = vor.u32 1.1754944e-38, %v783
      %v785 = vsel %vm782, %v784, %v780
      %v786 = vmul.f32 1.0, %v785
      %v788 = vperm.slane %v786, 0
      %v789 = vperm.slane %v786, 1
      %v790 = vperm.slane %v786, 2
      %v791 = vperm.slane %v786, 3
      %v792 = vperm.slane %v786, 4
      %v793 = vperm.slane %v786, 5
      %v794 = vperm.slane %v786, 6
      %v795 = vperm.slane %v786, 7
      %v804 = vmul.f32 %v706, %v788
      %v805 = vmul.f32 %v708, %v789
      %v806 = vmul.f32 %v710, %v790
      %v807 = vmul.f32 %v712, %v791
      %v808 = vmul.f32 %v714, %v792
      %v809 = vmul.f32 %v716, %v793
      %v810 = vmul.f32 %v718, %v794
      %v811 = vmul.f32 %v720, %v795
      %820 = vset.pattern.permute.xlu0 0
      %821 = vperm.xlu0 %820, %v804
      %v822 = vpop.permute.xlu0 %821
      %823 = vset.pattern.permute.xlu0 0
      %824 = vperm.xlu0 %823, %v805
      %v825 = vpop.permute.xlu0 %824
      %826 = vset.pattern.permute.xlu0 0
      %827 = vperm.xlu0 %826, %v806
      %v828 = vpop.permute.xlu0 %827
      %829 = vset.pattern.permute.xlu0 0
      %830 = vperm.xlu0 %829, %v807
      %v831 = vpop.permute.xlu0 %830
      %832 = vset.pattern.permute.xlu0 0
      %833 = vperm.xlu0 %832, %v808
      %v834 = vpop.permute.xlu0 %833
      %835 = vset.pattern.permute.xlu0 0
      %836 = vperm.xlu0 %835, %v809
      %v837 = vpop.permute.xlu0 %836
      %838 = vset.pattern.permute.xlu0 0
      %839 = vperm.xlu0 %838, %v810
      %v840 = vpop.permute.xlu0 %839
      %841 = vset.pattern.permute.xlu0 0
      %842 = vperm.xlu0 %841, %v811
      %v843 = vpop.permute.xlu0 %842
      %v844 = vperm.slane %v822, %v652
      %v845 = vperm.slane %v825, %v652
      %v846 = vperm.slane %v828, %v652
      %v847 = vperm.slane %v831, %v652
      %v848 = vperm.slane %v834, %v652
      %v849 = vperm.slane %v837, %v652
      %v850 = vperm.slane %v840, %v652
      %v851 = vperm.slane %v843, %v652
      %v852 = vsel %vm661, %v845, %v844
      %v853 = vsel %vm663, %v846, %v852
      %v854 = vsel %vm665, %v847, %v853
      %v855 = vsel %vm667, %v848, %v854
      %v856 = vsel %vm669, %v849, %v855
      %v857 = vsel %vm671, %v850, %v856
      %v858 = vsel %vm673, %v851, %v857
      %860 = vst.msk [vmem:[#allocation23] sm:$0xff] %vm676, %v858
      %v869 = vmul.f32 %v822, %v495
      %v870 = vmul.f32 %v825, %v496
      %v871 = vmul.f32 %v828, %v497
      %v872 = vmul.f32 %v831, %v498
      %v873 = vmul.f32 %v834, %v499
      %v874 = vmul.f32 %v837, %v500
      %v875 = vmul.f32 %v840, %v501
      %v876 = vmul.f32 %v843, %v502
      %v877 = vrot.slane %v869, 4
      %v878 = vadd.f32 %v869, %v877
      %v879 = vrot.slane %v878, 2
      %v880 = vadd.f32 %v878, %v879
      %v881 = vrot.slane %v880, 1
      %v882 = vadd.f32 %v880, %v881
      %v883 = vrot.slane %v870, 4
      %v884 = vadd.f32 %v870, %v883
      %v885 = vrot.slane %v884, 2
      %v886 = vadd.f32 %v884, %v885
      %v887 = vrot.slane %v886, 1
      %v888 = vadd.f32 %v886, %v887
      %v889 = vrot.slane %v871, 4
      %v890 = vadd.f32 %v871, %v889
      %v891 = vrot.slane %v890, 2
      %v892 = vadd.f32 %v890, %v891
      %v893 = vrot.slane %v892, 1
      %v894 = vadd.f32 %v892, %v893
      %v895 = vrot.slane %v872, 4
      %v896 = vadd.f32 %v872, %v895
      %v897 = vrot.slane %v896, 2
      %v898 = vadd.f32 %v896, %v897
      %v899 = vrot.slane %v898, 1
      %v900 = vadd.f32 %v898, %v899
      %v901 = vrot.slane %v873, 4
      %v902 = vadd.f32 %v873, %v901
      %v903 = vrot.slane %v902, 2
      %v904 = vadd.f32 %v902, %v903
      %v905 = vrot.slane %v904, 1
      %v906 = vadd.f32 %v904, %v905
      %v907 = vrot.slane %v874, 4
      %v908 = vadd.f32 %v874, %v907
      %v909 = vrot.slane %v908, 2
      %v910 = vadd.f32 %v908, %v909
      %v911 = vrot.slane %v910, 1
      %v912 = vadd.f32 %v910, %v911
      %v913 = vrot.slane %v875, 4
      %v914 = vadd.f32 %v875, %v913
      %v915 = vrot.slane %v914, 2
      %v916 = vadd.f32 %v914, %v915
      %v917 = vrot.slane %v916, 1
      %v918 = vadd.f32 %v916, %v917
      %v919 = vrot.slane %v876, 4
      %v920 = vadd.f32 %v876, %v919
      %v921 = vrot.slane %v920, 2
      %v922 = vadd.f32 %v920, %v921
      %v923 = vrot.slane %v922, 1
      %v924 = vadd.f32 %v922, %v923
      %v925 = vld [vmem:[#allocation15] sm:$0xff]
      %v926 = vld [vmem:[#allocation15 + $0x8] sm:$0xff]
      %v927 = vld [vmem:[#allocation15 + $0x10] sm:$0xff]
      %v928 = vld [vmem:[#allocation15 + $0x18] sm:$0xff]
      %v929 = vld [vmem:[#allocation15 + $0x20] sm:$0xff]
      %v930 = vld [vmem:[#allocation15 + $0x28] sm:$0xff]
      %v931 = vld [vmem:[#allocation15 + $0x30] sm:$0xff]
      %v932 = vld [vmem:[#allocation15 + $0x38] sm:$0xff]
      %v933 = vld [vmem:[#allocation15 + $0x40] sm:$0xff]
      %v934 = vld [vmem:[#allocation15 + $0x48] sm:$0xff]
      %v935 = vld [vmem:[#allocation15 + $0x50] sm:$0xff]
      %v936 = vld [vmem:[#allocation15 + $0x58] sm:$0xff]
      %v937 = vld [vmem:[#allocation15 + $0x60] sm:$0xff]
      %v938 = vld [vmem:[#allocation15 + $0x68] sm:$0xff]
      %v939 = vld [vmem:[#allocation15 + $0x70] sm:$0xff]
      %v940 = vld [vmem:[#allocation15 + $0x78] sm:$0xff]
      %v941 = vld [vmem:[#allocation17] sm:$0xff]
      %v942 = vld [vmem:[#allocation17 + $0x8] sm:$0xff]
      %v943 = vld [vmem:[#allocation17 + $0x10] sm:$0xff]
      %v944 = vld [vmem:[#allocation17 + $0x18] sm:$0xff]
      %v945 = vld [vmem:[#allocation17 + $0x20] sm:$0xff]
      %v946 = vld [vmem:[#allocation17 + $0x28] sm:$0xff]
      %v947 = vld [vmem:[#allocation17 + $0x30] sm:$0xff]
      %v948 = vld [vmem:[#allocation17 + $0x38] sm:$0xff]
      %v949 = vld [vmem:[#allocation17 + $0x40] sm:$0xff]
      %v950 = vld [vmem:[#allocation17 + $0x48] sm:$0xff]
      %v951 = vld [vmem:[#allocation17 + $0x50] sm:$0xff]
      %v952 = vld [vmem:[#allocation17 + $0x58] sm:$0xff]
      %v953 = vld [vmem:[#allocation17 + $0x60] sm:$0xff]
      %v954 = vld [vmem:[#allocation17 + $0x68] sm:$0xff]
      %v955 = vld [vmem:[#allocation17 + $0x70] sm:$0xff]
      %v956 = vld [vmem:[#allocation17 + $0x78] sm:$0xff]
      %v965 = vsel %vm661, %v888, %v882
      %v966 = vsel %vm663, %v894, %v965
      %v967 = vsel %vm665, %v900, %v966
      %v968 = vsel %vm667, %v906, %v967
      %v969 = vsel %vm669, %v912, %v968
      %v970 = vsel %vm671, %v918, %v969
      %v971 = vsel %vm673, %v924, %v970
      %973 = vmatpush.msra.mxu0 %v956
      %974 = vmatpush.msra.mxu0 %v955
      %975 = vmatpush.msra.mxu0 %v954
      %976 = vmatpush.msra.mxu0 %v953
      %977 = vmatpush.msra.mxu0 %v952
      %978 = vmatpush.msra.mxu0 %v951
      %979 = vmatpush.msra.mxu0 %v950
      %980 = vmatpush.msra.mxu0 %v949
      %981 = vmatpush.msra.mxu0 %v948
      %982 = vmatpush.msra.mxu0 %v947
      %983 = vmatpush.msra.mxu0 %v946
      %984 = vmatpush.msra.mxu0 %v945
      %985 = vmatpush.msra.mxu0 %v944
      %986 = vmatpush.msra.mxu0 %v943
      %987 = vmatpush.msra.mxu0 %v942
      %988 = vmatpush.msra.mxu0 %v941
      %989 = vmatmul.f32.gmra.mxu0 %v971
      %v990 = vpop.f32.mrf.mxu0
      %v991 = vadd.f32 0.0, %v990
      %992 = vdwg.mxu0
      %993 = vmatpush.msra.mxu0 %v940
      %994 = vmatpush.msra.mxu0 %v939
      %995 = vmatpush.msra.mxu0 %v938
      %996 = vmatpush.msra.mxu0 %v937
      %997 = vmatpush.msra.mxu0 %v936
      %998 = vmatpush.msra.mxu0 %v935
      %999 = vmatpush.msra.mxu0 %v934
      %1000 = vmatpush.msra.mxu0 %v933
      %1001 = vmatpush.msra.mxu0 %v932
      %1002 = vmatpush.msra.mxu0 %v931
      %1003 = vmatpush.msra.mxu0 %v930
      %1004 = vmatpush.msra.mxu0 %v929
      %1005 = vmatpush.msra.mxu0 %v928
      %1006 = vmatpush.msra.mxu0 %v927
      %1007 = vmatpush.msra.mxu0 %v926
      %1008 = vmatpush.msra.mxu0 %v925
      %1009 = vmatmul.f32.gmra.mxu0 %v494
      %v1010 = vpop.f32.mrf.mxu0
      %v1011 = vadd.f32 %v991, %v1010
      %1012 = vdwg.mxu0
      %v1013 = vld [vmem:[%s11] sm:$0x1]
      %v1015 = vperm.slane %v1013, 0
      %v1017 = vadd.f32 %v1011, %v1015
      %v1018 = vtanh.pop %v1017
      %1019 = vst [vmem:[#allocation2] sm:$0xff] %v1018
      %1020 = vst [vmem:[#allocation21] sm:$0xff] %v494
    $region101: #{tpu_custom_call.1} parent=1 // pred_fallthru
      _
    %v1021 = vld [vmem:[#allocation2] sm:$0xff]
    %v1022 = vld [vmem:[#allocation18] sm:$0xff]
    %v1023 = vld [vmem:[#allocation18 + $0x8] sm:$0xff]
    %v1024 = vld [vmem:[#allocation18 + $0x10] sm:$0xff]
    %v1025 = vld [vmem:[#allocation18 + $0x18] sm:$0xff]
    %v1026 = vld [vmem:[#allocation18 + $0x20] sm:$0xff]
    %v1027 = vld [vmem:[#allocation18 + $0x28] sm:$0xff]
    %v1028 = vld [vmem:[#allocation18 + $0x30] sm:$0xff]
    %v1029 = vld [vmem:[#allocation18 + $0x38] sm:$0xff]
    %v1030 = vld [vmem:[#allocation18 + $0x40] sm:$0xff]
    %v1031 = vld [vmem:[#allocation18 + $0x48] sm:$0xff]
    %v1032 = vld [vmem:[#allocation18 + $0x50] sm:$0xff]
    %v1033 = vld [vmem:[#allocation18 + $0x58] sm:$0xff]
    %v1034 = vld [vmem:[#allocation18 + $0x60] sm:$0xff]
    %v1035 = vld [vmem:[#allocation18 + $0x68] sm:$0xff]
    %v1036 = vld [vmem:[#allocation18 + $0x70] sm:$0xff]
    %v1037 = vld [vmem:[#allocation18 + $0x78] sm:$0xff]
    %v1038 = vld [vmem:[%s13] sm:$0x1]
    %v1040 = vperm.slane %v1038, 0
    %1042 = vmatpush.msra.mxu0 %v1037
    %1043 = vmatpush.msra.mxu0 %v1036
    %1044 = vmatpush.msra.mxu0 %v1035
    %1045 = vmatpush.msra.mxu0 %v1034
    %1046 = vmatpush.msra.mxu0 %v1033
    %1047 = vmatpush.msra.mxu0 %v1032
    %1048 = vmatpush.msra.mxu0 %v1031
    %1049 = vmatpush.msra.mxu0 %v1030
    %1050 = vmatpush.msra.mxu0 %v1029
    %1051 = vmatpush.msra.mxu0 %v1028
    %1052 = vmatpush.msra.mxu0 %v1027
    %1053 = vmatpush.msra.mxu0 %v1026
    %1054 = vmatpush.msra.mxu0 %v1025
    %1055 = vmatpush.msra.mxu0 %v1024
    %1056 = vmatpush.msra.mxu0 %v1023
    %1057 = vmatpush.msra.mxu0 %v1022
    %1058 = vmatmul.f32.gmra.mxu0 %v1021
    %v1059 = vpop.f32.mrf.mxu0
    %v1060 = vadd.f32 %v1040, %v1059
    %1061 = vdwg.mxu0
    %1062 = vst [vmem:[#allocation20] sm:$0xff] %v1060
    // Predicated region
    $region102: #{tpu_custom_call.1} parent=1 // pred_check
      _
    $region103: #{tpu_custom_call.1} parent=1 // pred_check_branch
      %1064 = sbr.rel (0) target = $region105
    $region104: #{tpu_custom_call.1} parent=1 // pred_region
      %1066 = vsyncadd [#allocation5], 0
      %s1068 = sshll.u32 [#allocation20], 4
      %s1069 = int_to_ptr.vmem [resolvable:$true] %s1068
      %s1070 = sshll.u32 %s14, 4
      %s1071 = int_to_ptr.hbm [resolvable:$true] %s1070
      %1073 = dma.vmem_to_hbm [thread:$0]  %s1069, 128, %s1071, [#allocation5]
    $region105: #{tpu_custom_call.1} parent=1 // pred_fallthru
      _
    // Predicated region
    $region106: #{tpu_custom_call.1} parent=1 // pred_check
      _
    $region107: #{tpu_custom_call.1} parent=1 // pred_check_branch
      %1075 = sbr.rel (0) target = $region109
    $region108: #{tpu_custom_call.1} parent=1 // pred_region
      %1077 = vsyncadd [#allocation22], 0
      %s1079 = sshll.u32 [#allocation21], 4
      %s1080 = int_to_ptr.vmem [resolvable:$true] %s1079
      %s1081 = sshll.u32 %s15, 4
      %s1082 = int_to_ptr.hbm [resolvable:$true] %s1081
      %1084 = dma.vmem_to_hbm [thread:$0]  %s1080, 128, %s1082, [#allocation22]
    $region109: #{tpu_custom_call.1} parent=1 // pred_fallthru
      _
    // Predicated region
    $region110: #{tpu_custom_call.1} parent=1 // pred_check
      _
    $region111: #{tpu_custom_call.1} parent=1 // pred_check_branch
      %1086 = sbr.rel (0) target = $region113
    $region112: #{tpu_custom_call.1} parent=1 // pred_region
      %1088 = vsyncadd [#allocation22], 0
      %s1090 = sshll.u32 [#allocation23], 4
      %s1091 = int_to_ptr.vmem [resolvable:$true] %s1090
      %s1092 = sshll.u32 %s16, 4
      %s1093 = int_to_ptr.hbm [resolvable:$true] %s1092
      %1095 = dma.vmem_to_hbm [thread:$0]  %s1091, 128, %s1093, [#allocation22]
    $region113: #{tpu_custom_call.1} parent=1 // pred_fallthru
      _
    // Predicated region
    $region114: #{tpu_custom_call.1} parent=1 // pred_check
      _
    $region115: #{tpu_custom_call.1} parent=1 // pred_check_branch
      %1097 = sbr.rel (0) target = $region117
    $region116: #{tpu_custom_call.1} parent=1 // pred_region
      %1099 = dma.done [#allocation5], 128
    $region117: #{tpu_custom_call.1} parent=1 // pred_fallthru
      _
    // Predicated region
    $region118: #{tpu_custom_call.1} parent=1 // pred_check
      _
    $region119: #{tpu_custom_call.1} parent=1 // pred_check_branch
      %1101 = sbr.rel (0) target = $region121
    $region120: #{tpu_custom_call.1} parent=1 // pred_region
      %1103 = dma.done [#allocation22], 128
    $region121: #{tpu_custom_call.1} parent=1 // pred_fallthru
      _
    // Predicated region
    $region122: #{tpu_custom_call.1} parent=1 // pred_check
      _
    $region123: #{tpu_custom_call.1} parent=1 // pred_check_branch
      %1105 = sbr.rel (0) target = $region125
    $region124: #{tpu_custom_call.1} parent=1 // pred_region
      %1107 = dma.done [#allocation22], 128
    $region125: #{tpu_custom_call.1} parent=1 // pred_fallthru
      _
    %1108 = vsyncpa [#allocation4], 1
    %1109 = vsyncpa [#allocation7], 1
    %1110 = vsyncpa [#allocation10], 1
    %1111 = vsyncpa [#allocation13], 1
    %1112 = vsyncpa [#allocation16], 1
    %1113 = vsyncpa [#allocation19], 1
    %1114 = vsyncpa [#allocation5], 1
    %1115 = vsyncpa [#allocation22], 1

</llo_original>
